<compile_context>
chip_gen: v6e
topology: v6e:2x2x1
jax: 0.10.0
libtpu: 0.0.40
codegen_flags: <defaults>
</compile_context>

<pallas_src>
import jax
import jax.numpy as jnp
from jax.experimental import pallas as pl
from jax.experimental.pallas import tpu as pltpu


def lstm_kernel(x_ref, w_ih_ref, w_hh_ref, b_ref, h0_ref, c0_ref,
                w_out_ref, b_out_ref, out_ref,
                gx_sc, h_sc, c_sc, max_sc):
    T, Bp, D = x_ref.shape
    H = h0_ref.shape[1]
    G = 4 * H                      # packed [i|f|g|o] gate width (== 128 here)

    # ---- Hoisted input projection: one bf16 MXU matmul, bias folded in. ------
    x_flat = x_ref[...].reshape(T * Bp, D)                       # bf16
    gx = jnp.dot(x_flat, w_ih_ref[...],
                 preferred_element_type=jnp.float32)             # f32 acc
    gx = gx + b_ref[...]                                         # f32 bias
    gx_sc[...] = gx.reshape(T, Bp, G).astype(gx_sc.dtype)        # bf16 scratch

    # ---- State init (once, outside the time loop). ---------------------------
    h_sc[...] = h0_ref[...]
    c_sc[...] = c0_ref[...]
    # NOTE: requires T >= 1 (max over an empty time axis would leave -inf).
    max_sc[...] = jnp.full(max_sc.shape, -jnp.inf, dtype=max_sc.dtype)

    # Lane -> gate-id map for the packed layout: lanes [2H, 3H) are the 'g'
    # (tanh) block, everything else is sigmoid.
    lane = jax.lax.broadcasted_iota(jnp.int32, (Bp, G), 1)
    is_g_lane = (lane >= 2 * H) & (lane < 3 * H)

    # ---- Sequential recurrence: only h_prev @ W_hh is on the critical path. --
    def step(t, carry):
        h_prev = h_sc[...]                                       # f32
        c_prev = c_sc[...]
        gates = gx_sc[t].astype(jnp.float32) + jnp.dot(
            h_prev.astype(jnp.bfloat16), w_hh_ref[...],
            preferred_element_type=jnp.float32)                  # (Bp, 4H) f32
        # One tanh + one sigmoid EUP push over the whole 4H-lane block, merged
        # with a VPU select.  Elementwise math stays f32 (v5e-safe).
        act = jnp.where(is_g_lane, jnp.tanh(gates), jax.nn.sigmoid(gates))
        i_g = act[:, 0 * H:1 * H]
        f_g = act[:, 1 * H:2 * H]
        g_g = act[:, 2 * H:3 * H]
        o_g = act[:, 3 * H:4 * H]
        c_new = f_g * c_prev + i_g * g_g
        h_new = o_g * jnp.tanh(c_new)
        c_sc[...] = c_new
        h_sc[...] = h_new
        max_sc[...] = jnp.maximum(max_sc[...], h_new)            # max_pool1d(T)
        return carry

    jax.lax.fori_loop(0, T, step, 0, unroll=True)

    # ---- Pool -> tanh -> linear head, lane-dense (Bp, Cp) store. -------------
    pooled = jnp.tanh(max_sc[...])
    out_ref[...] = (jnp.dot(pooled.astype(jnp.bfloat16), w_out_ref[...],
                            preferred_element_type=jnp.float32)
                    + b_out_ref[...])


def _round_up(x, m):
    return ((x + m - 1) // m) * m


def lstm_forward(x_ids, embed_w, w_ih, w_hh, b, h0, c0, w_out, b_out):
    T, B = x_ids.shape
    V, D = embed_w.shape
    H = w_hh.shape[0]
    C = w_out.shape[1]
    G = 4 * H

    LANE, SUB = 128, 8
    Cp = _round_up(C, LANE)            # lane-dense output tile
    Bp = _round_up(B, SUB)
    f32, bf16 = jnp.float32, jnp.bfloat16

    # Embedding lookup on the ORIGINAL (V, D) table; pad only the gathered
    # (T, B, D) result along batch (avoids a 4x-larger padded table in HBM).
    x_seq = jnp.take(embed_w.astype(f32), x_ids, axis=0)              # (T, B, D)
    x_seq = jnp.zeros((T, Bp, D), f32).at[:, :B, :].set(x_seq)        # pad batch
    x_seq = x_seq.astype(bf16)

    # Packed [i | f | g | o] gate layout, no per-gate lane padding.  MXU
    # operands in bf16; biases / states stay f32.
    w_ih_p = w_ih.astype(bf16)                                        # (D, 4H)
    w_hh_p = w_hh.astype(bf16)                                        # (H, 4H)
    b_p = b.astype(f32)                                               # (1, 4H)
    h0_p = jnp.zeros((Bp, H), f32).at[:B, :].set(h0[0])
    c0_p = jnp.zeros((Bp, H), f32).at[:B, :].set(c0[0])
    w_out_p = jnp.zeros((H, Cp), bf16).at[:, :C].set(w_out.astype(bf16))
    b_out_p = jnp.zeros((1, Cp), f32).at[:, :C].set(b_out.astype(f32))

    vmem = pl.BlockSpec(memory_space=pltpu.MemorySpace.VMEM)
    out_p = pl.pallas_call(
        lstm_kernel,
        out_shape=jax.ShapeDtypeStruct((Bp, Cp), f32),
        in_specs=[vmem] * 8,
        out_specs=vmem,
        scratch_shapes=[
            pltpu.VMEM((T, Bp, G), bf16),   # hoisted gates_x, all timesteps
            pltpu.VMEM((Bp, H), f32),       # h state
            pltpu.VMEM((Bp, H), f32),       # c state
            pltpu.VMEM((Bp, H), f32),       # running max over time
        ],
    )(x_seq, w_ih_p, w_hh_p, b_p, h0_p, c0_p, w_out_p, b_out_p)

    return out_p[:B, :C]


def lstm_ref(x_ids, embed_w, w_ih, w_hh, b, h0, c0, w_out, b_out):
    """Pure-JAX reference for correctness checking."""
    x_seq = jnp.take(embed_w, x_ids, axis=0)
    H = w_hh.shape[0]

    def step(carry, x_t):
        h, c = carry
        gates = x_t @ w_ih + h @ w_hh + b[0]
        i = jax.nn.sigmoid(gates[:, 0 * H:1 * H])
        f = jax.nn.sigmoid(gates[:, 1 * H:2 * H])
        g = jnp.tanh(gates[:, 2 * H:3 * H])
        o = jax.nn.sigmoid(gates[:, 3 * H:4 * H])
        c = f * c + i * g
        h = o * jnp.tanh(c)
        return (h, c), h

    (_, _), hs = jax.lax.scan(step, (h0[0], c0[0]), x_seq)
    pooled = jnp.tanh(jnp.max(hs, axis=0))
    return pooled @ w_out + b_out[0]


if __name__ == "__main__":
    # Small, deterministic configuration (mirrors the PyTorch module's args).
    V, D, H, C = 50, 32, 32, 4      # embed_num, embed_dim, lstm_hidden_dim, class_num
    T, B = 8, 2                     # seq_len, batch_size

    key = jax.random.PRNGKey(0)
    ks = jax.random.split(key, 8)

    embed_w = jax.random.normal(ks[0], (V, D), jnp.float32) * 0.1
    # PyTorch weight_ih_l0 is (4H, D); store transposed for x @ W layout.
    w_ih = jax.random.normal(ks[1], (D, 4 * H), jnp.float32) * 0.1
    w_hh = jax.random.normal(ks[2], (H, 4 * H), jnp.float32) * 0.1
    b = (jax.random.normal(ks[3], (1, 4 * H), jnp.float32) * 0.1)   # b_ih + b_hh folded
    h0 = jax.random.normal(ks[4], (1, B, H), jnp.float32)           # init_hidden: randn
    c0 = jax.random.normal(ks[5], (1, B, H), jnp.float32)
    w_out = jax.random.normal(ks[6], (H, C), jnp.float32) * 0.1
    b_out = jax.random.normal(ks[7], (1, C), jnp.float32) * 0.1

    # Token ids, shape (T, B) — seq-first, matching nn.LSTM's default layout.
    x_ids = jax.random.randint(jax.random.PRNGKey(42), (T, B), 0, V, jnp.int32)

    # TODO(synk): nn.Dropout / LSTM dropout are no-ops in this forward (eval /
    # single layer), so they are intentionally omitted.

    logits = lstm_forward(x_ids, embed_w, w_ih, w_hh, b, h0, c0, w_out, b_out)
    logits = jax.block_until_ready(logits)

    ref = lstm_ref(x_ids, embed_w, w_ih, w_hh, b, h0, c0, w_out, b_out)
    assert logits.shape == (B, C)
    # Tolerance relaxed for bf16 MXU operands (f32 accumulation / elementwise).
    assert jnp.allclose(logits, ref, rtol=2e-2, atol=2e-2), (logits, ref)

    print("KERNEL_OK")
</pallas_src>

<mosaic_0001>
module attributes {stable_mosaic.version = 11 : i64} {
  func.func @lstm_kernel(%arg0: memref<8x8x32xbf16, #tpu.memory_space<vmem>>, %arg1: memref<32x128xbf16, #tpu.memory_space<vmem>>, %arg2: memref<32x128xbf16, #tpu.memory_space<vmem>>, %arg3: memref<1x128xf32, #tpu.memory_space<vmem>>, %arg4: memref<8x32xf32, #tpu.memory_space<vmem>>, %arg5: memref<8x32xf32, #tpu.memory_space<vmem>>, %arg6: memref<32x128xbf16, #tpu.memory_space<vmem>>, %arg7: memref<1x128xf32, #tpu.memory_space<vmem>>, %arg8: memref<8x128xf32, #tpu.memory_space<vmem>>, %arg9: memref<8x8x128xbf16, #tpu.memory_space<vmem>>, %arg10: memref<8x32xf32, #tpu.memory_space<vmem>>, %arg11: memref<8x32xf32, #tpu.memory_space<vmem>>, %arg12: memref<8x32xf32, #tpu.memory_space<vmem>>) attributes {dimension_semantics = [], scalar_prefetch = 0 : i64, scratch_operands = 4 : i64, tpu.core_type = #tpu.core_type<tc>} {
    %c0 = arith.constant 0 : index
    %c0_0 = arith.constant 0 : index
    %c0_1 = arith.constant 0 : index
    %0 = vector.load %arg0[%c0, %c0_0, %c0_1] : memref<8x8x32xbf16, #tpu.memory_space<vmem>>, vector<8x8x32xbf16>
    %1 = vector.shape_cast %0 : vector<8x8x32xbf16> to vector<64x32xbf16>
    %c0_2 = arith.constant 0 : index
    %c0_3 = arith.constant 0 : index
    %2 = vector.load %arg1[%c0_2, %c0_3] : memref<32x128xbf16, #tpu.memory_space<vmem>>, vector<32x128xbf16>
    %cst = arith.constant dense<0.000000e+00> : vector<64x128xf32>
    %3 = tpu.matmul %1, %2, %cst {dimension_numbers = #tpu.dot_dimension_numbers<[1], [0], [0], [1], [0, 0, 1, 1], [], []>} : vector<64x32xbf16>, vector<32x128xbf16>, vector<64x128xf32> -> vector<64x128xf32>
    %c0_4 = arith.constant 0 : index
    %c0_5 = arith.constant 0 : index
    %4 = vector.load %arg3[%c0_4, %c0_5] : memref<1x128xf32, #tpu.memory_space<vmem>>, vector<1x128xf32>
    %5 = vector.broadcast %4 : vector<1x128xf32> to vector<64x128xf32>
    %6 = arith.addf %3, %5 : vector<64x128xf32>
    %7 = vector.shape_cast %6 : vector<64x128xf32> to vector<8x8x128xf32>
    %8 = arith.truncf %7 : vector<8x8x128xf32> to vector<8x8x128xbf16>
    %c0_6 = arith.constant 0 : index
    %c0_7 = arith.constant 0 : index
    %c0_8 = arith.constant 0 : index
    %9 = vector.load %arg9[%c0_6, %c0_7, %c0_8] : memref<8x8x128xbf16, #tpu.memory_space<vmem>>, vector<8x8x128xbf16>
    tpu.vector_store %arg9[%c0_6, %c0_7, %c0_8], %8 {strides = array<i32>} : memref<8x8x128xbf16, #tpu.memory_space<vmem>>, vector<8x8x128xbf16>,
    %c0_9 = arith.constant 0 : index
    %c0_10 = arith.constant 0 : index
    %10 = vector.load %arg4[%c0_9, %c0_10] : memref<8x32xf32, #tpu.memory_space<vmem>>, vector<8x32xf32>
    %c0_11 = arith.constant 0 : index
    %c0_12 = arith.constant 0 : index
    %11 = vector.load %arg10[%c0_11, %c0_12] : memref<8x32xf32, #tpu.memory_space<vmem>>, vector<8x32xf32>
    tpu.vector_store %arg10[%c0_11, %c0_12], %10 {strides = array<i32>} : memref<8x32xf32, #tpu.memory_space<vmem>>, vector<8x32xf32>,
    %c0_13 = arith.constant 0 : index
    %c0_14 = arith.constant 0 : index
    %12 = vector.load %arg5[%c0_13, %c0_14] : memref<8x32xf32, #tpu.memory_space<vmem>>, vector<8x32xf32>
    %c0_15 = arith.constant 0 : index
    %c0_16 = arith.constant 0 : index
    %13 = vector.load %arg11[%c0_15, %c0_16] : memref<8x32xf32, #tpu.memory_space<vmem>>, vector<8x32xf32>
    tpu.vector_store %arg11[%c0_15, %c0_16], %12 {strides = array<i32>} : memref<8x32xf32, #tpu.memory_space<vmem>>, vector<8x32xf32>,
    %cst_17 = arith.constant 0xFF800000 : f32
    %14 = vector.broadcast %cst_17 : f32 to vector<8x32xf32>
    %c0_18 = arith.constant 0 : index
    %c0_19 = arith.constant 0 : index
    %15 = vector.load %arg12[%c0_18, %c0_19] : memref<8x32xf32, #tpu.memory_space<vmem>>, vector<8x32xf32>
    tpu.vector_store %arg12[%c0_18, %c0_19], %14 {strides = array<i32>} : memref<8x32xf32, #tpu.memory_space<vmem>>, vector<8x32xf32>,
    %16 = tpu.iota {dimensions = array<i32: 1>} : vector<8x128xi32>
    %c64_i32 = arith.constant 64 : i32
    %17 = vector.broadcast %c64_i32 : i32 to vector<8x128xi32>
    %18 = arith.cmpi sge, %16, %17 : vector<8x128xi32>
    %c96_i32 = arith.constant 96 : i32
    %19 = vector.broadcast %c96_i32 : i32 to vector<8x128xi32>
    %20 = arith.cmpi slt, %16, %19 : vector<8x128xi32>
    %21 = arith.andi %18, %20 : vector<8x128xi1>
    %c0_i32 = arith.constant 0 : i32
    %c0_20 = arith.constant 0 : index
    %c0_21 = arith.constant 0 : index
    %22 = vector.load %arg10[%c0_20, %c0_21] : memref<8x32xf32, #tpu.memory_space<vmem>>, vector<8x32xf32>
    %c0_22 = arith.constant 0 : index
    %c0_23 = arith.constant 0 : index
    %23 = vector.load %arg11[%c0_22, %c0_23] : memref<8x32xf32, #tpu.memory_space<vmem>>, vector<8x32xf32>
    %24 = arith.index_cast %c0_i32 : i32 to index
    %c0_24 = arith.constant 0 : index
    %c0_25 = arith.constant 0 : index
    %25 = vector.load %arg9[%24, %c0_24, %c0_25] : memref<8x8x128xbf16, #tpu.memory_space<vmem>>, vector<1x8x128xbf16>
    %26 = vector.shape_cast %25 : vector<1x8x128xbf16> to vector<8x128xbf16>
    %27 = arith.extf %26 : vector<8x128xbf16> to vector<8x128xf32>
    %28 = arith.truncf %22 : vector<8x32xf32> to vector<8x32xbf16>
    %c0_26 = arith.constant 0 : index
    %c0_27 = arith.constant 0 : index
    %29 = vector.load %arg2[%c0_26, %c0_27] : memref<32x128xbf16, #tpu.memory_space<vmem>>, vector<32x128xbf16>
    %cst_28 = arith.constant dense<0.000000e+00> : vector<8x128xf32>
    %30 = tpu.matmul %28, %29, %cst_28 {dimension_numbers = #tpu.dot_dimension_numbers<[1], [0], [0], [1], [0, 0, 1, 1], [], []>} : vector<8x32xbf16>, vector<32x128xbf16>, vector<8x128xf32> -> vector<8x128xf32>
    %31 = arith.addf %27, %30 : vector<8x128xf32>
    %32 = math.tanh %31 : vector<8x128xf32>
    %33 = arith.negf %31 : vector<8x128xf32>
    %34 = math.exp %33 : vector<8x128xf32>
    %cst_29 = arith.constant 1.000000e+00 : f32
    %35 = vector.broadcast %cst_29 : f32 to vector<8x128xf32>
    %36 = arith.addf %35, %34 : vector<8x128xf32>
    %37 = arith.divf %35, %36 : vector<8x128xf32>
    %38 = arith.select %21, %32, %37 : vector<8x128xi1>, vector<8x128xf32>
    %39 = vector.extract_strided_slice %38 {offsets = [0, 0], sizes = [8, 32], strides = [1, 1]} : vector<8x128xf32> to vector<8x32xf32>
    %40 = vector.extract_strided_slice %38 {offsets = [0, 32], sizes = [8, 32], strides = [1, 1]} : vector<8x128xf32> to vector<8x32xf32>
    %41 = vector.extract_strided_slice %38 {offsets = [0, 64], sizes = [8, 32], strides = [1, 1]} : vector<8x128xf32> to vector<8x32xf32>
    %42 = vector.extract_strided_slice %38 {offsets = [0, 96], sizes = [8, 32], strides = [1, 1]} : vector<8x128xf32> to vector<8x32xf32>
    %43 = arith.mulf %40, %23 : vector<8x32xf32>
    %44 = arith.mulf %39, %41 : vector<8x32xf32>
    %45 = arith.addf %43, %44 : vector<8x32xf32>
    %46 = math.tanh %45 : vector<8x32xf32>
    %47 = arith.mulf %42, %46 : vector<8x32xf32>
    %c0_30 = arith.constant 0 : index
    %c0_31 = arith.constant 0 : index
    %48 = vector.load %arg11[%c0_30, %c0_31] : memref<8x32xf32, #tpu.memory_space<vmem>>, vector<8x32xf32>
    tpu.vector_store %arg11[%c0_30, %c0_31], %45 {strides = array<i32>} : memref<8x32xf32, #tpu.memory_space<vmem>>, vector<8x32xf32>,
    %c0_32 = arith.constant 0 : index
    %c0_33 = arith.constant 0 : index
    %49 = vector.load %arg10[%c0_32, %c0_33] : memref<8x32xf32, #tpu.memory_space<vmem>>, vector<8x32xf32>
    tpu.vector_store %arg10[%c0_32, %c0_33], %47 {strides = array<i32>} : memref<8x32xf32, #tpu.memory_space<vmem>>, vector<8x32xf32>,
    %c0_34 = arith.constant 0 : index
    %c0_35 = arith.constant 0 : index
    %50 = vector.load %arg12[%c0_34, %c0_35] : memref<8x32xf32, #tpu.memory_space<vmem>>, vector<8x32xf32>
    %51 = arith.maximumf %50, %47 : vector<8x32xf32>
    %c0_36 = arith.constant 0 : index
    %c0_37 = arith.constant 0 : index
    %52 = vector.load %arg12[%c0_36, %c0_37] : memref<8x32xf32, #tpu.memory_space<vmem>>, vector<8x32xf32>
    tpu.vector_store %arg12[%c0_36, %c0_37], %51 {strides = array<i32>} : memref<8x32xf32, #tpu.memory_space<vmem>>, vector<8x32xf32>,
    %c1_i32 = arith.constant 1 : i32
    %c0_38 = arith.constant 0 : index
    %c0_39 = arith.constant 0 : index
    %53 = vector.load %arg10[%c0_38, %c0_39] : memref<8x32xf32, #tpu.memory_space<vmem>>, vector<8x32xf32>
    %c0_40 = arith.constant 0 : index
    %c0_41 = arith.constant 0 : index
    %54 = vector.load %arg11[%c0_40, %c0_41] : memref<8x32xf32, #tpu.memory_space<vmem>>, vector<8x32xf32>
    %55 = arith.index_cast %c1_i32 : i32 to index
    %c0_42 = arith.constant 0 : index
    %c0_43 = arith.constant 0 : index
    %56 = vector.load %arg9[%55, %c0_42, %c0_43] : memref<8x8x128xbf16, #tpu.memory_space<vmem>>, vector<1x8x128xbf16>
    %57 = vector.shape_cast %56 : vector<1x8x128xbf16> to vector<8x128xbf16>
    %58 = arith.extf %57 : vector<8x128xbf16> to vector<8x128xf32>
    %59 = arith.truncf %53 : vector<8x32xf32> to vector<8x32xbf16>
    %c0_44 = arith.constant 0 : index
    %c0_45 = arith.constant 0 : index
    %60 = vector.load %arg2[%c0_44, %c0_45] : memref<32x128xbf16, #tpu.memory_space<vmem>>, vector<32x128xbf16>
    %cst_46 = arith.constant dense<0.000000e+00> : vector<8x128xf32>
    %61 = tpu.matmul %59, %60, %cst_46 {dimension_numbers = #tpu.dot_dimension_numbers<[1], [0], [0], [1], [0, 0, 1, 1], [], []>} : vector<8x32xbf16>, vector<32x128xbf16>, vector<8x128xf32> -> vector<8x128xf32>
    %62 = arith.addf %58, %61 : vector<8x128xf32>
    %63 = math.tanh %62 : vector<8x128xf32>
    %64 = arith.negf %62 : vector<8x128xf32>
    %65 = math.exp %64 : vector<8x128xf32>
    %cst_47 = arith.constant 1.000000e+00 : f32
    %66 = vector.broadcast %cst_47 : f32 to vector<8x128xf32>
    %67 = arith.addf %66, %65 : vector<8x128xf32>
    %68 = arith.divf %66, %67 : vector<8x128xf32>
    %69 = arith.select %21, %63, %68 : vector<8x128xi1>, vector<8x128xf32>
    %70 = vector.extract_strided_slice %69 {offsets = [0, 0], sizes = [8, 32], strides = [1, 1]} : vector<8x128xf32> to vector<8x32xf32>
    %71 = vector.extract_strided_slice %69 {offsets = [0, 32], sizes = [8, 32], strides = [1, 1]} : vector<8x128xf32> to vector<8x32xf32>
    %72 = vector.extract_strided_slice %69 {offsets = [0, 64], sizes = [8, 32], strides = [1, 1]} : vector<8x128xf32> to vector<8x32xf32>
    %73 = vector.extract_strided_slice %69 {offsets = [0, 96], sizes = [8, 32], strides = [1, 1]} : vector<8x128xf32> to vector<8x32xf32>
    %74 = arith.mulf %71, %54 : vector<8x32xf32>
    %75 = arith.mulf %70, %72 : vector<8x32xf32>
    %76 = arith.addf %74, %75 : vector<8x32xf32>
    %77 = math.tanh %76 : vector<8x32xf32>
    %78 = arith.mulf %73, %77 : vector<8x32xf32>
    %c0_48 = arith.constant 0 : index
    %c0_49 = arith.constant 0 : index
    %79 = vector.load %arg11[%c0_48, %c0_49] : memref<8x32xf32, #tpu.memory_space<vmem>>, vector<8x32xf32>
    tpu.vector_store %arg11[%c0_48, %c0_49], %76 {strides = array<i32>} : memref<8x32xf32, #tpu.memory_space<vmem>>, vector<8x32xf32>,
    %c0_50 = arith.constant 0 : index
    %c0_51 = arith.constant 0 : index
    %80 = vector.load %arg10[%c0_50, %c0_51] : memref<8x32xf32, #tpu.memory_space<vmem>>, vector<8x32xf32>
    tpu.vector_store %arg10[%c0_50, %c0_51], %78 {strides = array<i32>} : memref<8x32xf32, #tpu.memory_space<vmem>>, vector<8x32xf32>,
    %c0_52 = arith.constant 0 : index
    %c0_53 = arith.constant 0 : index
    %81 = vector.load %arg12[%c0_52, %c0_53] : memref<8x32xf32, #tpu.memory_space<vmem>>, vector<8x32xf32>
    %82 = arith.maximumf %81, %78 : vector<8x32xf32>
    %c0_54 = arith.constant 0 : index
    %c0_55 = arith.constant 0 : index
    %83 = vector.load %arg12[%c0_54, %c0_55] : memref<8x32xf32, #tpu.memory_space<vmem>>, vector<8x32xf32>
    tpu.vector_store %arg12[%c0_54, %c0_55], %82 {strides = array<i32>} : memref<8x32xf32, #tpu.memory_space<vmem>>, vector<8x32xf32>,
    %c2_i32 = arith.constant 2 : i32
    %c0_56 = arith.constant 0 : index
    %c0_57 = arith.constant 0 : index
    %84 = vector.load %arg10[%c0_56, %c0_57] : memref<8x32xf32, #tpu.memory_space<vmem>>, vector<8x32xf32>
    %c0_58 = arith.constant 0 : index
    %c0_59 = arith.constant 0 : index
    %85 = vector.load %arg11[%c0_58, %c0_59] : memref<8x32xf32, #tpu.memory_space<vmem>>, vector<8x32xf32>
    %86 = arith.index_cast %c2_i32 : i32 to index
    %c0_60 = arith.constant 0 : index
    %c0_61 = arith.constant 0 : index
    %87 = vector.load %arg9[%86, %c0_60, %c0_61] : memref<8x8x128xbf16, #tpu.memory_space<vmem>>, vector<1x8x128xbf16>
    %88 = vector.shape_cast %87 : vector<1x8x128xbf16> to vector<8x128xbf16>
    %89 = arith.extf %88 : vector<8x128xbf16> to vector<8x128xf32>
    %90 = arith.truncf %84 : vector<8x32xf32> to vector<8x32xbf16>
    %c0_62 = arith.constant 0 : index
    %c0_63 = arith.constant 0 : index
    %91 = vector.load %arg2[%c0_62, %c0_63] : memref<32x128xbf16, #tpu.memory_space<vmem>>, vector<32x128xbf16>
    %cst_64 = arith.constant dense<0.000000e+00> : vector<8x128xf32>
    %92 = tpu.matmul %90, %91, %cst_64 {dimension_numbers = #tpu.dot_dimension_numbers<[1], [0], [0], [1], [0, 0, 1, 1], [], []>} : vector<8x32xbf16>, vector<32x128xbf16>, vector<8x128xf32> -> vector<8x128xf32>
    %93 = arith.addf %89, %92 : vector<8x128xf32>
    %94 = math.tanh %93 : vector<8x128xf32>
    %95 = arith.negf %93 : vector<8x128xf32>
    %96 = math.exp %95 : vector<8x128xf32>
    %cst_65 = arith.constant 1.000000e+00 : f32
    %97 = vector.broadcast %cst_65 : f32 to vector<8x128xf32>
    %98 = arith.addf %97, %96 : vector<8x128xf32>
    %99 = arith.divf %97, %98 : vector<8x128xf32>
    %100 = arith.select %21, %94, %99 : vector<8x128xi1>, vector<8x128xf32>
    %101 = vector.extract_strided_slice %100 {offsets = [0, 0], sizes = [8, 32], strides = [1, 1]} : vector<8x128xf32> to vector<8x32xf32>
    %102 = vector.extract_strided_slice %100 {offsets = [0, 32], sizes = [8, 32], strides = [1, 1]} : vector<8x128xf32> to vector<8x32xf32>
    %103 = vector.extract_strided_slice %100 {offsets = [0, 64], sizes = [8, 32], strides = [1, 1]} : vector<8x128xf32> to vector<8x32xf32>
    %104 = vector.extract_strided_slice %100 {offsets = [0, 96], sizes = [8, 32], strides = [1, 1]} : vector<8x128xf32> to vector<8x32xf32>
    %105 = arith.mulf %102, %85 : vector<8x32xf32>
    %106 = arith.mulf %101, %103 : vector<8x32xf32>
    %107 = arith.addf %105, %106 : vector<8x32xf32>
    %108 = math.tanh %107 : vector<8x32xf32>
    %109 = arith.mulf %104, %108 : vector<8x32xf32>
    %c0_66 = arith.constant 0 : index
    %c0_67 = arith.constant 0 : index
    %110 = vector.load %arg11[%c0_66, %c0_67] : memref<8x32xf32, #tpu.memory_space<vmem>>, vector<8x32xf32>
    tpu.vector_store %arg11[%c0_66, %c0_67], %107 {strides = array<i32>} : memref<8x32xf32, #tpu.memory_space<vmem>>, vector<8x32xf32>,
    %c0_68 = arith.constant 0 : index
    %c0_69 = arith.constant 0 : index
    %111 = vector.load %arg10[%c0_68, %c0_69] : memref<8x32xf32, #tpu.memory_space<vmem>>, vector<8x32xf32>
    tpu.vector_store %arg10[%c0_68, %c0_69], %109 {strides = array<i32>} : memref<8x32xf32, #tpu.memory_space<vmem>>, vector<8x32xf32>,
    %c0_70 = arith.constant 0 : index
    %c0_71 = arith.constant 0 : index
    %112 = vector.load %arg12[%c0_70, %c0_71] : memref<8x32xf32, #tpu.memory_space<vmem>>, vector<8x32xf32>
    %113 = arith.maximumf %112, %109 : vector<8x32xf32>
    %c0_72 = arith.constant 0 : index
    %c0_73 = arith.constant 0 : index
    %114 = vector.load %arg12[%c0_72, %c0_73] : memref<8x32xf32, #tpu.memory_space<vmem>>, vector<8x32xf32>
    tpu.vector_store %arg12[%c0_72, %c0_73], %113 {strides = array<i32>} : memref<8x32xf32, #tpu.memory_space<vmem>>, vector<8x32xf32>,
    %c3_i32 = arith.constant 3 : i32
    %c0_74 = arith.constant 0 : index
    %c0_75 = arith.constant 0 : index
    %115 = vector.load %arg10[%c0_74, %c0_75] : memref<8x32xf32, #tpu.memory_space<vmem>>, vector<8x32xf32>
    %c0_76 = arith.constant 0 : index
    %c0_77 = arith.constant 0 : index
    %116 = vector.load %arg11[%c0_76, %c0_77] : memref<8x32xf32, #tpu.memory_space<vmem>>, vector<8x32xf32>
    %117 = arith.index_cast %c3_i32 : i32 to index
    %c0_78 = arith.constant 0 : index
    %c0_79 = arith.constant 0 : index
    %118 = vector.load %arg9[%117, %c0_78, %c0_79] : memref<8x8x128xbf16, #tpu.memory_space<vmem>>, vector<1x8x128xbf16>
    %119 = vector.shape_cast %118 : vector<1x8x128xbf16> to vector<8x128xbf16>
    %120 = arith.extf %119 : vector<8x128xbf16> to vector<8x128xf32>
    %121 = arith.truncf %115 : vector<8x32xf32> to vector<8x32xbf16>
    %c0_80 = arith.constant 0 : index
    %c0_81 = arith.constant 0 : index
    %122 = vector.load %arg2[%c0_80, %c0_81] : memref<32x128xbf16, #tpu.memory_space<vmem>>, vector<32x128xbf16>
    %cst_82 = arith.constant dense<0.000000e+00> : vector<8x128xf32>
    %123 = tpu.matmul %121, %122, %cst_82 {dimension_numbers = #tpu.dot_dimension_numbers<[1], [0], [0], [1], [0, 0, 1, 1], [], []>} : vector<8x32xbf16>, vector<32x128xbf16>, vector<8x128xf32> -> vector<8x128xf32>
    %124 = arith.addf %120, %123 : vector<8x128xf32>
    %125 = math.tanh %124 : vector<8x128xf32>
    %126 = arith.negf %124 : vector<8x128xf32>
    %127 = math.exp %126 : vector<8x128xf32>
    %cst_83 = arith.constant 1.000000e+00 : f32
    %128 = vector.broadcast %cst_83 : f32 to vector<8x128xf32>
    %129 = arith.addf %128, %127 : vector<8x128xf32>
    %130 = arith.divf %128, %129 : vector<8x128xf32>
    %131 = arith.select %21, %125, %130 : vector<8x128xi1>, vector<8x128xf32>
    %132 = vector.extract_strided_slice %131 {offsets = [0, 0], sizes = [8, 32], strides = [1, 1]} : vector<8x128xf32> to vector<8x32xf32>
    %133 = vector.extract_strided_slice %131 {offsets = [0, 32], sizes = [8, 32], strides = [1, 1]} : vector<8x128xf32> to vector<8x32xf32>
    %134 = vector.extract_strided_slice %131 {offsets = [0, 64], sizes = [8, 32], strides = [1, 1]} : vector<8x128xf32> to vector<8x32xf32>
    %135 = vector.extract_strided_slice %131 {offsets = [0, 96], sizes = [8, 32], strides = [1, 1]} : vector<8x128xf32> to vector<8x32xf32>
    %136 = arith.mulf %133, %116 : vector<8x32xf32>
    %137 = arith.mulf %132, %134 : vector<8x32xf32>
    %138 = arith.addf %136, %137 : vector<8x32xf32>
    %139 = math.tanh %138 : vector<8x32xf32>
    %140 = arith.mulf %135, %139 : vector<8x32xf32>
    %c0_84 = arith.constant 0 : index
    %c0_85 = arith.constant 0 : index
    %141 = vector.load %arg11[%c0_84, %c0_85] : memref<8x32xf32, #tpu.memory_space<vmem>>, vector<8x32xf32>
    tpu.vector_store %arg11[%c0_84, %c0_85], %138 {strides = array<i32>} : memref<8x32xf32, #tpu.memory_space<vmem>>, vector<8x32xf32>,
    %c0_86 = arith.constant 0 : index
    %c0_87 = arith.constant 0 : index
    %142 = vector.load %arg10[%c0_86, %c0_87] : memref<8x32xf32, #tpu.memory_space<vmem>>, vector<8x32xf32>
    tpu.vector_store %arg10[%c0_86, %c0_87], %140 {strides = array<i32>} : memref<8x32xf32, #tpu.memory_space<vmem>>, vector<8x32xf32>,
    %c0_88 = arith.constant 0 : index
    %c0_89 = arith.constant 0 : index
    %143 = vector.load %arg12[%c0_88, %c0_89] : memref<8x32xf32, #tpu.memory_space<vmem>>, vector<8x32xf32>
    %144 = arith.maximumf %143, %140 : vector<8x32xf32>
    %c0_90 = arith.constant 0 : index
    %c0_91 = arith.constant 0 : index
    %145 = vector.load %arg12[%c0_90, %c0_91] : memref<8x32xf32, #tpu.memory_space<vmem>>, vector<8x32xf32>
    tpu.vector_store %arg12[%c0_90, %c0_91], %144 {strides = array<i32>} : memref<8x32xf32, #tpu.memory_space<vmem>>, vector<8x32xf32>,
    %c4_i32 = arith.constant 4 : i32
    %c0_92 = arith.constant 0 : index
    %c0_93 = arith.constant 0 : index
    %146 = vector.load %arg10[%c0_92, %c0_93] : memref<8x32xf32, #tpu.memory_space<vmem>>, vector<8x32xf32>
    %c0_94 = arith.constant 0 : index
    %c0_95 = arith.constant 0 : index
    %147 = vector.load %arg11[%c0_94, %c0_95] : memref<8x32xf32, #tpu.memory_space<vmem>>, vector<8x32xf32>
    %148 = arith.index_cast %c4_i32 : i32 to index
    %c0_96 = arith.constant 0 : index
    %c0_97 = arith.constant 0 : index
    %149 = vector.load %arg9[%148, %c0_96, %c0_97] : memref<8x8x128xbf16, #tpu.memory_space<vmem>>, vector<1x8x128xbf16>
    %150 = vector.shape_cast %149 : vector<1x8x128xbf16> to vector<8x128xbf16>
    %151 = arith.extf %150 : vector<8x128xbf16> to vector<8x128xf32>
    %152 = arith.truncf %146 : vector<8x32xf32> to vector<8x32xbf16>
    %c0_98 = arith.constant 0 : index
    %c0_99 = arith.constant 0 : index
    %153 = vector.load %arg2[%c0_98, %c0_99] : memref<32x128xbf16, #tpu.memory_space<vmem>>, vector<32x128xbf16>
    %cst_100 = arith.constant dense<0.000000e+00> : vector<8x128xf32>
    %154 = tpu.matmul %152, %153, %cst_100 {dimension_numbers = #tpu.dot_dimension_numbers<[1], [0], [0], [1], [0, 0, 1, 1], [], []>} : vector<8x32xbf16>, vector<32x128xbf16>, vector<8x128xf32> -> vector<8x128xf32>
    %155 = arith.addf %151, %154 : vector<8x128xf32>
    %156 = math.tanh %155 : vector<8x128xf32>
    %157 = arith.negf %155 : vector<8x128xf32>
    %158 = math.exp %157 : vector<8x128xf32>
    %cst_101 = arith.constant 1.000000e+00 : f32
    %159 = vector.broadcast %cst_101 : f32 to vector<8x128xf32>
    %160 = arith.addf %159, %158 : vector<8x128xf32>
    %161 = arith.divf %159, %160 : vector<8x128xf32>
    %162 = arith.select %21, %156, %161 : vector<8x128xi1>, vector<8x128xf32>
    %163 = vector.extract_strided_slice %162 {offsets = [0, 0], sizes = [8, 32], strides = [1, 1]} : vector<8x128xf32> to vector<8x32xf32>
    %164 = vector.extract_strided_slice %162 {offsets = [0, 32], sizes = [8, 32], strides = [1, 1]} : vector<8x128xf32> to vector<8x32xf32>
    %165 = vector.extract_strided_slice %162 {offsets = [0, 64], sizes = [8, 32], strides = [1, 1]} : vector<8x128xf32> to vector<8x32xf32>
    %166 = vector.extract_strided_slice %162 {offsets = [0, 96], sizes = [8, 32], strides = [1, 1]} : vector<8x128xf32> to vector<8x32xf32>
    %167 = arith.mulf %164, %147 : vector<8x32xf32>
    %168 = arith.mulf %163, %165 : vector<8x32xf32>
    %169 = arith.addf %167, %168 : vector<8x32xf32>
    %170 = math.tanh %169 : vector<8x32xf32>
    %171 = arith.mulf %166, %170 : vector<8x32xf32>
    %c0_102 = arith.constant 0 : index
    %c0_103 = arith.constant 0 : index
    %172 = vector.load %arg11[%c0_102, %c0_103] : memref<8x32xf32, #tpu.memory_space<vmem>>, vector<8x32xf32>
    tpu.vector_store %arg11[%c0_102, %c0_103], %169 {strides = array<i32>} : memref<8x32xf32, #tpu.memory_space<vmem>>, vector<8x32xf32>,
    %c0_104 = arith.constant 0 : index
    %c0_105 = arith.constant 0 : index
    %173 = vector.load %arg10[%c0_104, %c0_105] : memref<8x32xf32, #tpu.memory_space<vmem>>, vector<8x32xf32>
    tpu.vector_store %arg10[%c0_104, %c0_105], %171 {strides = array<i32>} : memref<8x32xf32, #tpu.memory_space<vmem>>, vector<8x32xf32>,
    %c0_106 = arith.constant 0 : index
    %c0_107 = arith.constant 0 : index
    %174 = vector.load %arg12[%c0_106, %c0_107] : memref<8x32xf32, #tpu.memory_space<vmem>>, vector<8x32xf32>
    %175 = arith.maximumf %174, %171 : vector<8x32xf32>
    %c0_108 = arith.constant 0 : index
    %c0_109 = arith.constant 0 : index
    %176 = vector.load %arg12[%c0_108, %c0_109] : memref<8x32xf32, #tpu.memory_space<vmem>>, vector<8x32xf32>
    tpu.vector_store %arg12[%c0_108, %c0_109], %175 {strides = array<i32>} : memref<8x32xf32, #tpu.memory_space<vmem>>, vector<8x32xf32>,
    %c5_i32 = arith.constant 5 : i32
    %c0_110 = arith.constant 0 : index
    %c0_111 = arith.constant 0 : index
    %177 = vector.load %arg10[%c0_110, %c0_111] : memref<8x32xf32, #tpu.memory_space<vmem>>, vector<8x32xf32>
    %c0_112 = arith.constant 0 : index
    %c0_113 = arith.constant 0 : index
    %178 = vector.load %arg11[%c0_112, %c0_113] : memref<8x32xf32, #tpu.memory_space<vmem>>, vector<8x32xf32>
    %179 = arith.index_cast %c5_i32 : i32 to index
    %c0_114 = arith.constant 0 : index
    %c0_115 = arith.constant 0 : index
    %180 = vector.load %arg9[%179, %c0_114, %c0_115] : memref<8x8x128xbf16, #tpu.memory_space<vmem>>, vector<1x8x128xbf16>
    %181 = vector.shape_cast %180 : vector<1x8x128xbf16> to vector<8x128xbf16>
    %182 = arith.extf %181 : vector<8x128xbf16> to vector<8x128xf32>
    %183 = arith.truncf %177 : vector<8x32xf32> to vector<8x32xbf16>
    %c0_116 = arith.constant 0 : index
    %c0_117 = arith.constant 0 : index
    %184 = vector.load %arg2[%c0_116, %c0_117] : memref<32x128xbf16, #tpu.memory_space<vmem>>, vector<32x128xbf16>
    %cst_118 = arith.constant dense<0.000000e+00> : vector<8x128xf32>
    %185 = tpu.matmul %183, %184, %cst_118 {dimension_numbers = #tpu.dot_dimension_numbers<[1], [0], [0], [1], [0, 0, 1, 1], [], []>} : vector<8x32xbf16>, vector<32x128xbf16>, vector<8x128xf32> -> vector<8x128xf32>
    %186 = arith.addf %182, %185 : vector<8x128xf32>
    %187 = math.tanh %186 : vector<8x128xf32>
    %188 = arith.negf %186 : vector<8x128xf32>
    %189 = math.exp %188 : vector<8x128xf32>
    %cst_119 = arith.constant 1.000000e+00 : f32
    %190 = vector.broadcast %cst_119 : f32 to vector<8x128xf32>
    %191 = arith.addf %190, %189 : vector<8x128xf32>
    %192 = arith.divf %190, %191 : vector<8x128xf32>
    %193 = arith.select %21, %187, %192 : vector<8x128xi1>, vector<8x128xf32>
    %194 = vector.extract_strided_slice %193 {offsets = [0, 0], sizes = [8, 32], strides = [1, 1]} : vector<8x128xf32> to vector<8x32xf32>
    %195 = vector.extract_strided_slice %193 {offsets = [0, 32], sizes = [8, 32], strides = [1, 1]} : vector<8x128xf32> to vector<8x32xf32>
    %196 = vector.extract_strided_slice %193 {offsets = [0, 64], sizes = [8, 32], strides = [1, 1]} : vector<8x128xf32> to vector<8x32xf32>
    %197 = vector.extract_strided_slice %193 {offsets = [0, 96], sizes = [8, 32], strides = [1, 1]} : vector<8x128xf32> to vector<8x32xf32>
    %198 = arith.mulf %195, %178 : vector<8x32xf32>
    %199 = arith.mulf %194, %196 : vector<8x32xf32>
    %200 = arith.addf %198, %199 : vector<8x32xf32>
    %201 = math.tanh %200 : vector<8x32xf32>
    %202 = arith.mulf %197, %201 : vector<8x32xf32>
    %c0_120 = arith.constant 0 : index
    %c0_121 = arith.constant 0 : index
    %203 = vector.load %arg11[%c0_120, %c0_121] : memref<8x32xf32, #tpu.memory_space<vmem>>, vector<8x32xf32>
    tpu.vector_store %arg11[%c0_120, %c0_121], %200 {strides = array<i32>} : memref<8x32xf32, #tpu.memory_space<vmem>>, vector<8x32xf32>,
    %c0_122 = arith.constant 0 : index
    %c0_123 = arith.constant 0 : index
    %204 = vector.load %arg10[%c0_122, %c0_123] : memref<8x32xf32, #tpu.memory_space<vmem>>, vector<8x32xf32>
    tpu.vector_store %arg10[%c0_122, %c0_123], %202 {strides = array<i32>} : memref<8x32xf32, #tpu.memory_space<vmem>>, vector<8x32xf32>,
    %c0_124 = arith.constant 0 : index
    %c0_125 = arith.constant 0 : index
    %205 = vector.load %arg12[%c0_124, %c0_125] : memref<8x32xf32, #tpu.memory_space<vmem>>, vector<8x32xf32>
    %206 = arith.maximumf %205, %202 : vector<8x32xf32>
    %c0_126 = arith.constant 0 : index
    %c0_127 = arith.constant 0 : index
    %207 = vector.load %arg12[%c0_126, %c0_127] : memref<8x32xf32, #tpu.memory_space<vmem>>, vector<8x32xf32>
    tpu.vector_store %arg12[%c0_126, %c0_127], %206 {strides = array<i32>} : memref<8x32xf32, #tpu.memory_space<vmem>>, vector<8x32xf32>,
    %c6_i32 = arith.constant 6 : i32
    %c0_128 = arith.constant 0 : index
    %c0_129 = arith.constant 0 : index
    %208 = vector.load %arg10[%c0_128, %c0_129] : memref<8x32xf32, #tpu.memory_space<vmem>>, vector<8x32xf32>
    %c0_130 = arith.constant 0 : index
    %c0_131 = arith.constant 0 : index
    %209 = vector.load %arg11[%c0_130, %c0_131] : memref<8x32xf32, #tpu.memory_space<vmem>>, vector<8x32xf32>
    %210 = arith.index_cast %c6_i32 : i32 to index
    %c0_132 = arith.constant 0 : index
    %c0_133 = arith.constant 0 : index
    %211 = vector.load %arg9[%210, %c0_132, %c0_133] : memref<8x8x128xbf16, #tpu.memory_space<vmem>>, vector<1x8x128xbf16>
    %212 = vector.shape_cast %211 : vector<1x8x128xbf16> to vector<8x128xbf16>
    %213 = arith.extf %212 : vector<8x128xbf16> to vector<8x128xf32>
    %214 = arith.truncf %208 : vector<8x32xf32> to vector<8x32xbf16>
    %c0_134 = arith.constant 0 : index
    %c0_135 = arith.constant 0 : index
    %215 = vector.load %arg2[%c0_134, %c0_135] : memref<32x128xbf16, #tpu.memory_space<vmem>>, vector<32x128xbf16>
    %cst_136 = arith.constant dense<0.000000e+00> : vector<8x128xf32>
    %216 = tpu.matmul %214, %215, %cst_136 {dimension_numbers = #tpu.dot_dimension_numbers<[1], [0], [0], [1], [0, 0, 1, 1], [], []>} : vector<8x32xbf16>, vector<32x128xbf16>, vector<8x128xf32> -> vector<8x128xf32>
    %217 = arith.addf %213, %216 : vector<8x128xf32>
    %218 = math.tanh %217 : vector<8x128xf32>
    %219 = arith.negf %217 : vector<8x128xf32>
    %220 = math.exp %219 : vector<8x128xf32>
    %cst_137 = arith.constant 1.000000e+00 : f32
    %221 = vector.broadcast %cst_137 : f32 to vector<8x128xf32>
    %222 = arith.addf %221, %220 : vector<8x128xf32>
    %223 = arith.divf %221, %222 : vector<8x128xf32>
    %224 = arith.select %21, %218, %223 : vector<8x128xi1>, vector<8x128xf32>
    %225 = vector.extract_strided_slice %224 {offsets = [0, 0], sizes = [8, 32], strides = [1, 1]} : vector<8x128xf32> to vector<8x32xf32>
    %226 = vector.extract_strided_slice %224 {offsets = [0, 32], sizes = [8, 32], strides = [1, 1]} : vector<8x128xf32> to vector<8x32xf32>
    %227 = vector.extract_strided_slice %224 {offsets = [0, 64], sizes = [8, 32], strides = [1, 1]} : vector<8x128xf32> to vector<8x32xf32>
    %228 = vector.extract_strided_slice %224 {offsets = [0, 96], sizes = [8, 32], strides = [1, 1]} : vector<8x128xf32> to vector<8x32xf32>
    %229 = arith.mulf %226, %209 : vector<8x32xf32>
    %230 = arith.mulf %225, %227 : vector<8x32xf32>
    %231 = arith.addf %229, %230 : vector<8x32xf32>
    %232 = math.tanh %231 : vector<8x32xf32>
    %233 = arith.mulf %228, %232 : vector<8x32xf32>
    %c0_138 = arith.constant 0 : index
    %c0_139 = arith.constant 0 : index
    %234 = vector.load %arg11[%c0_138, %c0_139] : memref<8x32xf32, #tpu.memory_space<vmem>>, vector<8x32xf32>
    tpu.vector_store %arg11[%c0_138, %c0_139], %231 {strides = array<i32>} : memref<8x32xf32, #tpu.memory_space<vmem>>, vector<8x32xf32>,
    %c0_140 = arith.constant 0 : index
    %c0_141 = arith.constant 0 : index
    %235 = vector.load %arg10[%c0_140, %c0_141] : memref<8x32xf32, #tpu.memory_space<vmem>>, vector<8x32xf32>
    tpu.vector_store %arg10[%c0_140, %c0_141], %233 {strides = array<i32>} : memref<8x32xf32, #tpu.memory_space<vmem>>, vector<8x32xf32>,
    %c0_142 = arith.constant 0 : index
    %c0_143 = arith.constant 0 : index
    %236 = vector.load %arg12[%c0_142, %c0_143] : memref<8x32xf32, #tpu.memory_space<vmem>>, vector<8x32xf32>
    %237 = arith.maximumf %236, %233 : vector<8x32xf32>
    %c0_144 = arith.constant 0 : index
    %c0_145 = arith.constant 0 : index
    %238 = vector.load %arg12[%c0_144, %c0_145] : memref<8x32xf32, #tpu.memory_space<vmem>>, vector<8x32xf32>
    tpu.vector_store %arg12[%c0_144, %c0_145], %237 {strides = array<i32>} : memref<8x32xf32, #tpu.memory_space<vmem>>, vector<8x32xf32>,
    %c7_i32 = arith.constant 7 : i32
    %c0_146 = arith.constant 0 : index
    %c0_147 = arith.constant 0 : index
    %239 = vector.load %arg10[%c0_146, %c0_147] : memref<8x32xf32, #tpu.memory_space<vmem>>, vector<8x32xf32>
    %c0_148 = arith.constant 0 : index
    %c0_149 = arith.constant 0 : index
    %240 = vector.load %arg11[%c0_148, %c0_149] : memref<8x32xf32, #tpu.memory_space<vmem>>, vector<8x32xf32>
    %241 = arith.index_cast %c7_i32 : i32 to index
    %c0_150 = arith.constant 0 : index
    %c0_151 = arith.constant 0 : index
    %242 = vector.load %arg9[%241, %c0_150, %c0_151] : memref<8x8x128xbf16, #tpu.memory_space<vmem>>, vector<1x8x128xbf16>
    %243 = vector.shape_cast %242 : vector<1x8x128xbf16> to vector<8x128xbf16>
    %244 = arith.extf %243 : vector<8x128xbf16> to vector<8x128xf32>
    %245 = arith.truncf %239 : vector<8x32xf32> to vector<8x32xbf16>
    %c0_152 = arith.constant 0 : index
    %c0_153 = arith.constant 0 : index
    %246 = vector.load %arg2[%c0_152, %c0_153] : memref<32x128xbf16, #tpu.memory_space<vmem>>, vector<32x128xbf16>
    %cst_154 = arith.constant dense<0.000000e+00> : vector<8x128xf32>
    %247 = tpu.matmul %245, %246, %cst_154 {dimension_numbers = #tpu.dot_dimension_numbers<[1], [0], [0], [1], [0, 0, 1, 1], [], []>} : vector<8x32xbf16>, vector<32x128xbf16>, vector<8x128xf32> -> vector<8x128xf32>
    %248 = arith.addf %244, %247 : vector<8x128xf32>
    %249 = math.tanh %248 : vector<8x128xf32>
    %250 = arith.negf %248 : vector<8x128xf32>
    %251 = math.exp %250 : vector<8x128xf32>
    %cst_155 = arith.constant 1.000000e+00 : f32
    %252 = vector.broadcast %cst_155 : f32 to vector<8x128xf32>
    %253 = arith.addf %252, %251 : vector<8x128xf32>
    %254 = arith.divf %252, %253 : vector<8x128xf32>
    %255 = arith.select %21, %249, %254 : vector<8x128xi1>, vector<8x128xf32>
    %256 = vector.extract_strided_slice %255 {offsets = [0, 0], sizes = [8, 32], strides = [1, 1]} : vector<8x128xf32> to vector<8x32xf32>
    %257 = vector.extract_strided_slice %255 {offsets = [0, 32], sizes = [8, 32], strides = [1, 1]} : vector<8x128xf32> to vector<8x32xf32>
    %258 = vector.extract_strided_slice %255 {offsets = [0, 64], sizes = [8, 32], strides = [1, 1]} : vector<8x128xf32> to vector<8x32xf32>
    %259 = vector.extract_strided_slice %255 {offsets = [0, 96], sizes = [8, 32], strides = [1, 1]} : vector<8x128xf32> to vector<8x32xf32>
    %260 = arith.mulf %257, %240 : vector<8x32xf32>
    %261 = arith.mulf %256, %258 : vector<8x32xf32>
    %262 = arith.addf %260, %261 : vector<8x32xf32>
    %263 = math.tanh %262 : vector<8x32xf32>
    %264 = arith.mulf %259, %263 : vector<8x32xf32>
    %c0_156 = arith.constant 0 : index
    %c0_157 = arith.constant 0 : index
    %265 = vector.load %arg11[%c0_156, %c0_157] : memref<8x32xf32, #tpu.memory_space<vmem>>, vector<8x32xf32>
    tpu.vector_store %arg11[%c0_156, %c0_157], %262 {strides = array<i32>} : memref<8x32xf32, #tpu.memory_space<vmem>>, vector<8x32xf32>,
    %c0_158 = arith.constant 0 : index
    %c0_159 = arith.constant 0 : index
    %266 = vector.load %arg10[%c0_158, %c0_159] : memref<8x32xf32, #tpu.memory_space<vmem>>, vector<8x32xf32>
    tpu.vector_store %arg10[%c0_158, %c0_159], %264 {strides = array<i32>} : memref<8x32xf32, #tpu.memory_space<vmem>>, vector<8x32xf32>,
    %c0_160 = arith.constant 0 : index
    %c0_161 = arith.constant 0 : index
    %267 = vector.load %arg12[%c0_160, %c0_161] : memref<8x32xf32, #tpu.memory_space<vmem>>, vector<8x32xf32>
    %268 = arith.maximumf %267, %264 : vector<8x32xf32>
    %c0_162 = arith.constant 0 : index
    %c0_163 = arith.constant 0 : index
    %269 = vector.load %arg12[%c0_162, %c0_163] : memref<8x32xf32, #tpu.memory_space<vmem>>, vector<8x32xf32>
    tpu.vector_store %arg12[%c0_162, %c0_163], %268 {strides = array<i32>} : memref<8x32xf32, #tpu.memory_space<vmem>>, vector<8x32xf32>,
    %c8_i32 = arith.constant 8 : i32
    %c0_164 = arith.constant 0 : index
    %c0_165 = arith.constant 0 : index
    %270 = vector.load %arg12[%c0_164, %c0_165] : memref<8x32xf32, #tpu.memory_space<vmem>>, vector<8x32xf32>
    %271 = math.tanh %270 : vector<8x32xf32>
    %272 = arith.truncf %271 : vector<8x32xf32> to vector<8x32xbf16>
    %c0_166 = arith.constant 0 : index
    %c0_167 = arith.constant 0 : index
    %273 = vector.load %arg6[%c0_166, %c0_167] : memref<32x128xbf16, #tpu.memory_space<vmem>>, vector<32x128xbf16>
    %cst_168 = arith.constant dense<0.000000e+00> : vector<8x128xf32>
    %274 = tpu.matmul %272, %273, %cst_168 {dimension_numbers = #tpu.dot_dimension_numbers<[1], [0], [0], [1], [0, 0, 1, 1], [], []>} : vector<8x32xbf16>, vector<32x128xbf16>, vector<8x128xf32> -> vector<8x128xf32>
    %c0_169 = arith.constant 0 : index
    %c0_170 = arith.constant 0 : index
    %275 = vector.load %arg7[%c0_169, %c0_170] : memref<1x128xf32, #tpu.memory_space<vmem>>, vector<1x128xf32>
    %276 = vector.broadcast %275 : vector<1x128xf32> to vector<8x128xf32>
    %277 = arith.addf %274, %276 : vector<8x128xf32>
    %c0_171 = arith.constant 0 : index
    %c0_172 = arith.constant 0 : index
    %278 = vector.load %arg8[%c0_171, %c0_172] : memref<8x128xf32, #tpu.memory_space<vmem>>, vector<8x128xf32>
    tpu.vector_store %arg8[%c0_171, %c0_172], %277 {strides = array<i32>} : memref<8x128xf32, #tpu.memory_space<vmem>>, vector<8x128xf32>,
    return
  }
}

</mosaic_0001>

<llo_original>
// kernel: tpu_custom_call.1
$region0: #{tpu_custom_call.1}
  #allocation0 [shape = 'u32[]', space=smem, size = 0x4, offset = 0x4, fixed_abs, tag = 'smem constant byte address 0x4 - core index']
  #allocation1 [shape = 'u32[144,128]{1,0:T(1,128)}', space=vmem, size = 0x12000, scoped, tag = 'internal scratch']
  #allocation2 [shape = 'bf16[8,8,128]{2,1,0:T(8,128)(2,1)}', space=vmem, size = 0x4000, scoped, tag = 'scratch operand']
  #allocation3 [shape = 'f32[8,32]{1,0:T(8,128)}', space=vmem, size = 0x1000, scoped, tag = 'scratch operand']
  #allocation4 [shape = 'f32[8,32]{1,0:T(8,128)}', space=vmem, size = 0x1000, scoped, tag = 'scratch operand']
  #allocation5 [shape = 'f32[8,32]{1,0:T(8,128)}', space=vmem, size = 0x1000, scoped, tag = 'scratch operand']
  %s0 = inlined_call_operand.hbm [shape: bf16[8,8,32], index: 0, kind: input, shape index: {}]
  %s1 = inlined_call_operand.hbm [shape: bf16[32,128], index: 1, kind: input, shape index: {}]
  %s2 = inlined_call_operand.hbm [shape: bf16[32,128], index: 2, kind: input, shape index: {}]
  %s3 = inlined_call_operand.vmem [shape: f32[1,128], index: 3, kind: input, shape index: {}]
  %s4 = inlined_call_operand.hbm [shape: f32[8,32], index: 4, kind: input, shape index: {}]
  %s5 = inlined_call_operand.vmem [shape: f32[8,32], index: 5, kind: input, shape index: {}]
  %s6 = inlined_call_operand.hbm [shape: bf16[32,128], index: 6, kind: input, shape index: {}]
  %s7 = inlined_call_operand.vmem [shape: f32[1,128], index: 7, kind: input, shape index: {}]
  %s8 = inlined_call_operand.hbm [shape: f32[8,128], index: 8, kind: output, shape index: {}]
  %s9 = sld [smem:[#allocation0]]
  $region62: #{tpu_custom_call.1} parent=0
    _
  %s11 = ssub.s32 1, %s9
  %s12 = scalar_select 0, %s11, %s9
  $region1: #{tpu_custom_call.1} parent=0
    #allocation6 [shape = 'u8[16384]{0}', space=vmem, size = 0x4000, scoped, tag = 'input window, operand 0, single buffered']
    #allocation7 [shape = 's32[1]{0}', space=sflag, size = 0x4, scoped, tag = 'scoped memory for tpu_custom_call.1']
    #allocation8 [shape = 's32[1]{0}', space=sflag, size = 0x4, scoped, tag = 'scoped memory for tpu_custom_call.1']
    #allocation9 [shape = 'u8[8192]{0}', space=vmem, size = 0x2000, scoped, tag = 'input window, operand 1, single buffered']
    #allocation10 [shape = 's32[1]{0}', space=sflag, size = 0x4, scoped, tag = 'scoped memory for tpu_custom_call.1']
    #allocation11 [shape = 'u8[8192]{0}', space=vmem, size = 0x2000, scoped, tag = 'input window, operand 2, single buffered']
    #allocation12 [shape = 'u8[4096]{0}', space=vmem, size = 0x1000, scoped, tag = 'input window, operand 4, single buffered']
    #allocation13 [shape = 's32[1]{0}', space=sflag, size = 0x4, scoped, tag = 'scoped memory for tpu_custom_call.1']
    #allocation14 [shape = 'u8[8192]{0}', space=vmem, size = 0x2000, scoped, tag = 'input window, operand 6, single buffered']
    #allocation15 [shape = 'u8[4096]{0}', space=vmem, size = 0x1000, scoped, tag = 'output window, operand 0, single buffered']
    %13 = vsyncpa [#allocation7], 0
    %14 = vsyncpa [#allocation10], 0
    %15 = vsyncpa [#allocation13], 0
    %16 = vsyncpa [#allocation8], 0
    // Predicated region
    $region2: #{tpu_custom_call.1} parent=1 // pred_check
      _
    $region3: #{tpu_custom_call.1} parent=1 // pred_check_branch
      %18 = sbr.rel (0) target = $region5
    $region4: #{tpu_custom_call.1} parent=1 // pred_region
      %s20 = ssub.s32 512, 512
      %21 = vsyncadd [#allocation7], %s20
      %s22 = sshll.u32 [#allocation6], 4
      %s23 = int_to_ptr.vmem [resolvable:$true] %s22
      %28 = dma.hbm_to_vmem [thread:$0]  %s0, 512, %s23, [#allocation7], 64, 64, 4
    $region5: #{tpu_custom_call.1} parent=1 // pred_fallthru
      _
    // Predicated region
    $region6: #{tpu_custom_call.1} parent=1 // pred_check
      _
    $region7: #{tpu_custom_call.1} parent=1 // pred_check_branch
      %30 = sbr.rel (0) target = $region9
    $region8: #{tpu_custom_call.1} parent=1 // pred_region
      %s32 = ssub.s32 256, 256
      %33 = vsyncadd [#allocation10], %s32
      %s34 = sshll.u32 [#allocation9], 4
      %s35 = int_to_ptr.vmem [resolvable:$true] %s34
      %40 = dma.hbm_to_vmem [thread:$0]  %s1, 256, %s35, [#allocation10], 64, 64, 4
    $region9: #{tpu_custom_call.1} parent=1 // pred_fallthru
      _
    // Predicated region
    $region10: #{tpu_custom_call.1} parent=1 // pred_check
      _
    $region11: #{tpu_custom_call.1} parent=1 // pred_check_branch
      %42 = sbr.rel (0) target = $region13
    $region12: #{tpu_custom_call.1} parent=1 // pred_region
      %s44 = ssub.s32 256, 256
      %45 = vsyncadd [#allocation10], %s44
      %s46 = sshll.u32 [#allocation11], 4
      %s47 = int_to_ptr.vmem [resolvable:$true] %s46
      %52 = dma.hbm_to_vmem [thread:$0]  %s2, 256, %s47, [#allocation10], 64, 64, 4
    $region13: #{tpu_custom_call.1} parent=1 // pred_fallthru
      _
    // Predicated region
    $region14: #{tpu_custom_call.1} parent=1 // pred_check
      _
    $region15: #{tpu_custom_call.1} parent=1 // pred_check_branch
      %54 = sbr.rel (0) target = $region17
    $region16: #{tpu_custom_call.1} parent=1 // pred_region
      _
    $region17: #{tpu_custom_call.1} parent=1 // pred_fallthru
      _
    // Predicated region
    $region18: #{tpu_custom_call.1} parent=1 // pred_check
      _
    $region19: #{tpu_custom_call.1} parent=1 // pred_check_branch
      %56 = sbr.rel (0) target = $region21
    $region20: #{tpu_custom_call.1} parent=1 // pred_region
      %s58 = ssub.s32 128, 128
      %59 = vsyncadd [#allocation13], %s58
      %s61 = sshll.u32 [#allocation12], 4
      %s62 = int_to_ptr.vmem [resolvable:$true] %s61
      %64 = dma.hbm_to_vmem [thread:$0]  %s4, 128, %s62, [#allocation13]
    $region21: #{tpu_custom_call.1} parent=1 // pred_fallthru
      _
    // Predicated region
    $region22: #{tpu_custom_call.1} parent=1 // pred_check
      _
    $region23: #{tpu_custom_call.1} parent=1 // pred_check_branch
      %66 = sbr.rel (0) target = $region25
    $region24: #{tpu_custom_call.1} parent=1 // pred_region
      _
    $region25: #{tpu_custom_call.1} parent=1 // pred_fallthru
      _
    // Predicated region
    $region26: #{tpu_custom_call.1} parent=1 // pred_check
      _
    $region27: #{tpu_custom_call.1} parent=1 // pred_check_branch
      %68 = sbr.rel (0) target = $region29
    $region28: #{tpu_custom_call.1} parent=1 // pred_region
      %s70 = ssub.s32 256, 256
      %71 = vsyncadd [#allocation13], %s70
      %s72 = sshll.u32 [#allocation14], 4
      %s73 = int_to_ptr.vmem [resolvable:$true] %s72
      %78 = dma.hbm_to_vmem [thread:$0]  %s6, 256, %s73, [#allocation13], 64, 64, 4
    $region29: #{tpu_custom_call.1} parent=1 // pred_fallthru
      _
    // Predicated region
    $region30: #{tpu_custom_call.1} parent=1 // pred_check
      _
    $region31: #{tpu_custom_call.1} parent=1 // pred_check_branch
      %80 = sbr.rel (0) target = $region33
    $region32: #{tpu_custom_call.1} parent=1 // pred_region
      _
    $region33: #{tpu_custom_call.1} parent=1 // pred_fallthru
      _
    // Predicated region
    $region34: #{tpu_custom_call.1} parent=1 // pred_check
      _
    $region35: #{tpu_custom_call.1} parent=1 // pred_check_branch
      %82 = sbr.rel (0) target = $region37
    $region36: #{tpu_custom_call.1} parent=1 // pred_region
      %83 = dma.done [#allocation7], 512
    $region37: #{tpu_custom_call.1} parent=1 // pred_fallthru
      _
    // Predicated region
    $region38: #{tpu_custom_call.1} parent=1 // pred_check
      _
    $region39: #{tpu_custom_call.1} parent=1 // pred_check_branch
      %85 = sbr.rel (0) target = $region41
    $region40: #{tpu_custom_call.1} parent=1 // pred_region
      %86 = dma.done [#allocation10], 256
    $region41: #{tpu_custom_call.1} parent=1 // pred_fallthru
      _
    // Predicated region
    $region42: #{tpu_custom_call.1} parent=1 // pred_check
      _
    $region43: #{tpu_custom_call.1} parent=1 // pred_check_branch
      %88 = sbr.rel (0) target = $region45
    $region44: #{tpu_custom_call.1} parent=1 // pred_region
      %89 = dma.done [#allocation10], 256
    $region45: #{tpu_custom_call.1} parent=1 // pred_fallthru
      _
    // Predicated region
    $region46: #{tpu_custom_call.1} parent=1 // pred_check
      _
    $region47: #{tpu_custom_call.1} parent=1 // pred_check_branch
      %91 = sbr.rel (0) target = $region49
    $region48: #{tpu_custom_call.1} parent=1 // pred_region
      %92 = dma.done [#allocation13], 128
    $region49: #{tpu_custom_call.1} parent=1 // pred_fallthru
      _
    // Predicated region
    $region50: #{tpu_custom_call.1} parent=1 // pred_check
      _
    $region51: #{tpu_custom_call.1} parent=1 // pred_check_branch
      %94 = sbr.rel (0) target = $region53
    $region52: #{tpu_custom_call.1} parent=1 // pred_region
      %95 = dma.done [#allocation13], 256
    $region53: #{tpu_custom_call.1} parent=1 // pred_fallthru
      _
    %v97 = vld [vmem:[#allocation6] sm:$0xf]
    %v98 = vld [vmem:[#allocation6 + $0x4] sm:$0xf]
    %v99 = vld [vmem:[#allocation6 + $0x8] sm:$0xf]
    %v100 = vld [vmem:[#allocation6 + $0xc] sm:$0xf]
    %v101 = vld [vmem:[#allocation6 + $0x10] sm:$0xf]
    %v102 = vld [vmem:[#allocation6 + $0x14] sm:$0xf]
    %v103 = vld [vmem:[#allocation6 + $0x18] sm:$0xf]
    %v104 = vld [vmem:[#allocation6 + $0x1c] sm:$0xf]
    %v105 = vld [vmem:[#allocation9] sm:$0xf]
    %v106 = vld [vmem:[#allocation9 + $0x4] sm:$0xf]
    %v107 = vld [vmem:[#allocation9 + $0x8] sm:$0xf]
    %v108 = vld [vmem:[#allocation9 + $0xc] sm:$0xf]
    %v109 = vld [vmem:[%s3] sm:$0x1]
    %v111 = vlaneseq
    %v112 = vshrl.u32 %v111, 7
    %v113 = vsub.s32 0, %v112
    %v114 = vrot.slane %v109, %v113
    %v124 = vunpack.c.l.b16 %v97
    %v125 = vunpack.c.l.b16 %v98
    %v126 = vunpack.c.l.b16 %v99
    %v127 = vunpack.c.l.b16 %v100
    %v128 = vunpack.c.l.b16 %v101
    %v129 = vunpack.c.l.b16 %v102
    %v130 = vunpack.c.l.b16 %v103
    %v131 = vunpack.c.l.b16 %v104
    %v132 = vpack.c.b16 %v125, %v124
    %v133 = vpack.c.b16 %v127, %v126
    %v134 = vpack.c.b16 %v129, %v128
    %v135 = vpack.c.b16 %v131, %v130
    %v140 = vunpack.c.l.b16 %v105
    %v141 = vunpack.c.l.b16 %v106
    %v142 = vunpack.c.l.b16 %v107
    %v143 = vunpack.c.l.b16 %v108
    %v144 = vpack.c.b16 %v141, %v140
    %v145 = vpack.c.b16 %v143, %v142
    %vm148 = vcmask 261120
    %v150 = vsel %vm148, %v132, 0
    %v153 = vsel %vm148, %v133, 0
    %v156 = vsel %vm148, %v134, 0
    %v159 = vsel %vm148, %v135, 0
    %161 = vmatprep.subr.bf16.mxu0 0
    %162 = vmatpush1.bf16.msra.mxu0 0
    %163 = vmatprep.subr.bf16.mxu0 0
    %164 = vmatpush1.bf16.msra.mxu0 0
    %165 = vmatprep.subr.bf16.mxu0 0
    %166 = vmatpush1.bf16.msra.mxu0 0
    %167 = vmatprep.subr.bf16.mxu0 0
    %168 = vmatpush1.bf16.msra.mxu0 0
    %169 = vmatprep.subr.bf16.mxu0 0
    %170 = vmatpush1.bf16.msra.mxu0 0
    %171 = vmatprep.subr.bf16.mxu0 0
    %172 = vmatpush1.bf16.msra.mxu0 0
    %173 = vmatprep.subr.bf16.mxu0 0
    %174 = vmatpush1.bf16.msra.mxu0 %v145
    %175 = vmatprep.subr.bf16.mxu0 0
    %176 = vmatpush1.bf16.msra.mxu0 %v144
    %177 = vmatprep.subr.bf16.mxu0 0
    %178 = vmatpush2.bf16.msra.mxu0 0
    %179 = vmatprep.subr.bf16.mxu0 0
    %180 = vmatpush2.bf16.msra.mxu0 0
    %181 = vmatprep.subr.bf16.mxu0 0
    %182 = vmatpush2.bf16.msra.mxu0 0
    %183 = vmatprep.subr.bf16.mxu0 0
    %184 = vmatpush2.bf16.msra.mxu0 0
    %185 = vmatprep.subr.bf16.mxu0 0
    %186 = vmatpush2.bf16.msra.mxu0 0
    %187 = vmatprep.subr.bf16.mxu0 0
    %188 = vmatpush2.bf16.msra.mxu0 0
    %189 = vmatprep.subr.bf16.mxu0 0
    %190 = vmatpush2.bf16.msra.mxu0 0
    %191 = vmatprep.subr.bf16.mxu0 0
    %192 = vmatpush2.bf16.msra.mxu0 0
    %193 = vmatprep.mubr.bf16.mxu0 0
    %194 = vmatmul.mubr.bf16.gmra.mxu0 %v150
    %v195 = vpop.f32.mrf.mxu0
    %v196 = vadd.f32 %v114, %v195
    %v197 = vpop.f32.mrf.mxu0
    %v198 = vpop.f32.mrf.mxu0
    %v199 = vadd.f32 %v114, %v198
    %v200 = vpop.f32.mrf.mxu0
    %201 = vmatprep.mubr.bf16.mxu0 0
    %202 = vmatmul.mubr.bf16.gmra.mxu0 %v153
    %v203 = vpop.f32.mrf.mxu0
    %v204 = vadd.f32 %v114, %v203
    %v205 = vpop.f32.mrf.mxu0
    %v206 = vpop.f32.mrf.mxu0
    %v207 = vadd.f32 %v114, %v206
    %v208 = vpop.f32.mrf.mxu0
    %209 = vmatprep.mubr.bf16.mxu0 0
    %210 = vmatmul.mubr.bf16.gmra.mxu0 %v156
    %v211 = vpop.f32.mrf.mxu0
    %v212 = vadd.f32 %v114, %v211
    %v213 = vpop.f32.mrf.mxu0
    %v214 = vpop.f32.mrf.mxu0
    %v215 = vadd.f32 %v114, %v214
    %v216 = vpop.f32.mrf.mxu0
    %217 = vmatprep.mubr.bf16.mxu0 0
    %218 = vmatmul.mubr.bf16.gmra.mxu0 %v159
    %v219 = vpop.f32.mrf.mxu0
    %v220 = vadd.f32 %v114, %v219
    %v221 = vpop.f32.mrf.mxu0
    %v222 = vpop.f32.mrf.mxu0
    %v223 = vadd.f32 %v114, %v222
    %v224 = vpop.f32.mrf.mxu0
    %225 = vdwg.mxu0
    %v226 = vpack.c.bf16 %v196, %v196
    %v227 = vpack.c.bf16 %v199, %v199
    %v228 = vpack.c.bf16 %v204, %v204
    %v229 = vpack.c.bf16 %v207, %v207
    %v230 = vpack.c.bf16 %v212, %v212
    %v231 = vpack.c.bf16 %v215, %v215
    %v232 = vpack.c.bf16 %v220, %v220
    %v233 = vpack.c.bf16 %v223, %v223
    %234 = vst [vmem:[#allocation2] sm:$0xf] %v226
    %235 = vst [vmem:[#allocation2 + $0x4] sm:$0xf] %v227
    %236 = vst [vmem:[#allocation2 + $0x8] sm:$0xf] %v228
    %237 = vst [vmem:[#allocation2 + $0xc] sm:$0xf] %v229
    %238 = vst [vmem:[#allocation2 + $0x10] sm:$0xf] %v230
    %239 = vst [vmem:[#allocation2 + $0x14] sm:$0xf] %v231
    %240 = vst [vmem:[#allocation2 + $0x18] sm:$0xf] %v232
    %241 = vst [vmem:[#allocation2 + $0x1c] sm:$0xf] %v233
    %v242 = vld [vmem:[#allocation12] sm:$0xff]
    %243 = vst.msk [vmem:[#allocation3] sm:$0xff] %vm148, %v242
    %v244 = vld [vmem:[%s5] sm:$0xff]
    %245 = vst.msk [vmem:[#allocation4] sm:$0xff] %vm148, %v244
    %246 = vst.msk [vmem:[#allocation5] sm:$0xff] %vm148, -inf
    %v247 = vlaneseq
    %v248 = vand.u32 %v247, 127
    %vm249 = vcmp.ge.s32.totalorder %v248, 64
    %vm250 = vcmp.lt.s32.totalorder %v248, 96
    %vm251 = vmand %vm249, %vm250
    %v252 = vld [vmem:[#allocation3] sm:$0xff]
    %v253 = vld [vmem:[#allocation4] sm:$0xff]
    %v254 = vld [vmem:[#allocation2] sm:$0xf]
    %v255 = vunpack.c.l.bf16 %v254
    %v256 = vpack.c.bf16 %v252, %v252
    %v257 = vld [vmem:[#allocation11] sm:$0xf]
    %v258 = vld [vmem:[#allocation11 + $0x4] sm:$0xf]
    %v259 = vld [vmem:[#allocation11 + $0x8] sm:$0xf]
    %v260 = vld [vmem:[#allocation11 + $0xc] sm:$0xf]
    %v265 = vunpack.c.l.b16 %v257
    %v266 = vunpack.c.l.b16 %v258
    %v267 = vunpack.c.l.b16 %v259
    %v268 = vunpack.c.l.b16 %v260
    %v269 = vpack.c.b16 %v266, %v265
    %v270 = vpack.c.b16 %v268, %v267
    %v274 = vsel %vm148, %v256, 0
    %276 = vmatprep.subr.bf16.mxu0 0
    %277 = vmatpush1.bf16.msra.mxu0 0
    %278 = vmatprep.subr.bf16.mxu0 0
    %279 = vmatpush1.bf16.msra.mxu0 0
    %280 = vmatprep.subr.bf16.mxu0 0
    %281 = vmatpush1.bf16.msra.mxu0 0
    %282 = vmatprep.subr.bf16.mxu0 0
    %283 = vmatpush1.bf16.msra.mxu0 0
    %284 = vmatprep.subr.bf16.mxu0 0
    %285 = vmatpush1.bf16.msra.mxu0 0
    %286 = vmatprep.subr.bf16.mxu0 0
    %287 = vmatpush1.bf16.msra.mxu0 0
    %288 = vmatprep.subr.bf16.mxu0 0
    %289 = vmatpush1.bf16.msra.mxu0 %v270
    %290 = vmatprep.subr.bf16.mxu0 0
    %291 = vmatpush1.bf16.msra.mxu0 %v269
    %292 = vmatprep.subr.bf16.mxu0 0
    %293 = vmatpush2.bf16.msra.mxu0 0
    %294 = vmatprep.subr.bf16.mxu0 0
    %295 = vmatpush2.bf16.msra.mxu0 0
    %296 = vmatprep.subr.bf16.mxu0 0
    %297 = vmatpush2.bf16.msra.mxu0 0
    %298 = vmatprep.subr.bf16.mxu0 0
    %299 = vmatpush2.bf16.msra.mxu0 0
    %300 = vmatprep.subr.bf16.mxu0 0
    %301 = vmatpush2.bf16.msra.mxu0 0
    %302 = vmatprep.subr.bf16.mxu0 0
    %303 = vmatpush2.bf16.msra.mxu0 0
    %304 = vmatprep.subr.bf16.mxu0 0
    %305 = vmatpush2.bf16.msra.mxu0 0
    %306 = vmatprep.subr.bf16.mxu0 0
    %307 = vmatpush2.bf16.msra.mxu0 0
    %308 = vmatprep.mubr.bf16.mxu0 0
    %309 = vmatmul.mubr.bf16.gmra.mxu0 %v274
    %v310 = vpop.f32.mrf.mxu0
    %v311 = vadd.f32 0.0, %v310
    %v312 = vpop.f32.mrf.mxu0
    %v313 = vpop.f32.mrf.mxu0
    %v314 = vpop.f32.mrf.mxu0
    %315 = vdwg.mxu0
    %v316 = vadd.f32 %v255, %v311
    %v317 = vtanh.pop %v316
    %v318 = vxor.u32 %v316, 2147483648
    %v319 = vmul.f32 %v318, 1.442695
    %v320 = vpow.pop %v319
    %v321 = vadd.f32 %v320, 1.0
    %v322 = vrcp.pop %v321
    %v323 = vmul.f32 1.0, %v322
    %v324 = vsel %vm251, %v317, %v323
    %326 = vrot.lane.b32.xlu0 %v253, 32
    %v327 = vpop.permute.xlu0 %326
    %v329 = vmul.f32 %v324, %v327
    %331 = vrot.lane.b32.xlu0 %v324, 64
    %v332 = vpop.permute.xlu0 %331
    %v334 = vmul.f32 %v324, %v332
    %336 = vrot.lane.b32.xlu0 %v334, 32
    %v337 = vpop.permute.xlu0 %336
    %v339 = vadd.f32 %v329, %v337
    %v340 = vtanh.pop %v339
    %342 = vrot.lane.b32.xlu0 %v340, 64
    %v343 = vpop.permute.xlu0 %342
    %v345 = vmul.f32 %v324, %v343
    %347 = vrot.lane.b32.xlu0 %v339, 96
    %v348 = vpop.permute.xlu0 %347
    %350 = vst.msk [vmem:[#allocation4] sm:$0xff] %vm148, %v348
    %352 = vrot.lane.b32.xlu0 %v345, 32
    %v353 = vpop.permute.xlu0 %352
    %355 = vst.msk [vmem:[#allocation3] sm:$0xff] %vm148, %v353
    %v356 = vld [vmem:[#allocation5] sm:$0xff]
    %v357 = vmax.f32 %v356, %v353
    %358 = vst.msk [vmem:[#allocation5] sm:$0xff] %vm148, %v357
    %v359 = vld [vmem:[#allocation3] sm:$0xff]
    %v360 = vld [vmem:[#allocation4] sm:$0xff]
    %s361 = scalar_lea.vmem [#allocation2], 4
    %v362 = vld [vmem:[%s361] sm:$0xf]
    %v363 = vunpack.c.l.bf16 %v362
    %v364 = vpack.c.bf16 %v359, %v359
    %v365 = vld [vmem:[#allocation11] sm:$0xf]
    %v366 = vld [vmem:[#allocation11 + $0x4] sm:$0xf]
    %v367 = vld [vmem:[#allocation11 + $0x8] sm:$0xf]
    %v368 = vld [vmem:[#allocation11 + $0xc] sm:$0xf]
    %v373 = vunpack.c.l.b16 %v365
    %v374 = vunpack.c.l.b16 %v366
    %v375 = vunpack.c.l.b16 %v367
    %v376 = vunpack.c.l.b16 %v368
    %v377 = vpack.c.b16 %v374, %v373
    %v378 = vpack.c.b16 %v376, %v375
    %v382 = vsel %vm148, %v364, 0
    %384 = vmatprep.subr.bf16.mxu0 0
    %385 = vmatpush1.bf16.msra.mxu0 0
    %386 = vmatprep.subr.bf16.mxu0 0
    %387 = vmatpush1.bf16.msra.mxu0 0
    %388 = vmatprep.subr.bf16.mxu0 0
    %389 = vmatpush1.bf16.msra.mxu0 0
    %390 = vmatprep.subr.bf16.mxu0 0
    %391 = vmatpush1.bf16.msra.mxu0 0
    %392 = vmatprep.subr.bf16.mxu0 0
    %393 = vmatpush1.bf16.msra.mxu0 0
    %394 = vmatprep.subr.bf16.mxu0 0
    %395 = vmatpush1.bf16.msra.mxu0 0
    %396 = vmatprep.subr.bf16.mxu0 0
    %397 = vmatpush1.bf16.msra.mxu0 %v378
    %398 = vmatprep.subr.bf16.mxu0 0
    %399 = vmatpush1.bf16.msra.mxu0 %v377
    %400 = vmatprep.subr.bf16.mxu0 0
    %401 = vmatpush2.bf16.msra.mxu0 0
    %402 = vmatprep.subr.bf16.mxu0 0
    %403 = vmatpush2.bf16.msra.mxu0 0
    %404 = vmatprep.subr.bf16.mxu0 0
    %405 = vmatpush2.bf16.msra.mxu0 0
    %406 = vmatprep.subr.bf16.mxu0 0
    %407 = vmatpush2.bf16.msra.mxu0 0
    %408 = vmatprep.subr.bf16.mxu0 0
    %409 = vmatpush2.bf16.msra.mxu0 0
    %410 = vmatprep.subr.bf16.mxu0 0
    %411 = vmatpush2.bf16.msra.mxu0 0
    %412 = vmatprep.subr.bf16.mxu0 0
    %413 = vmatpush2.bf16.msra.mxu0 0
    %414 = vmatprep.subr.bf16.mxu0 0
    %415 = vmatpush2.bf16.msra.mxu0 0
    %416 = vmatprep.mubr.bf16.mxu0 0
    %417 = vmatmul.mubr.bf16.gmra.mxu0 %v382
    %v418 = vpop.f32.mrf.mxu0
    %v419 = vadd.f32 0.0, %v418
    %v420 = vpop.f32.mrf.mxu0
    %v421 = vpop.f32.mrf.mxu0
    %v422 = vpop.f32.mrf.mxu0
    %423 = vdwg.mxu0
    %v424 = vadd.f32 %v363, %v419
    %v425 = vtanh.pop %v424
    %v426 = vxor.u32 %v424, 2147483648
    %v427 = vmul.f32 %v426, 1.442695
    %v428 = vpow.pop %v427
    %v429 = vadd.f32 %v428, 1.0
    %v430 = vrcp.pop %v429
    %v431 = vmul.f32 1.0, %v430
    %v432 = vsel %vm251, %v425, %v431
    %434 = vrot.lane.b32.xlu0 %v360, 32
    %v435 = vpop.permute.xlu0 %434
    %v437 = vmul.f32 %v432, %v435
    %439 = vrot.lane.b32.xlu0 %v432, 64
    %v440 = vpop.permute.xlu0 %439
    %v442 = vmul.f32 %v432, %v440
    %444 = vrot.lane.b32.xlu0 %v442, 32
    %v445 = vpop.permute.xlu0 %444
    %v447 = vadd.f32 %v437, %v445
    %v448 = vtanh.pop %v447
    %450 = vrot.lane.b32.xlu0 %v448, 64
    %v451 = vpop.permute.xlu0 %450
    %v453 = vmul.f32 %v432, %v451
    %455 = vrot.lane.b32.xlu0 %v447, 96
    %v456 = vpop.permute.xlu0 %455
    %458 = vst.msk [vmem:[#allocation4] sm:$0xff] %vm148, %v456
    %460 = vrot.lane.b32.xlu0 %v453, 32
    %v461 = vpop.permute.xlu0 %460
    %463 = vst.msk [vmem:[#allocation3] sm:$0xff] %vm148, %v461
    %v464 = vld [vmem:[#allocation5] sm:$0xff]
    %v465 = vmax.f32 %v464, %v461
    %466 = vst.msk [vmem:[#allocation5] sm:$0xff] %vm148, %v465
    %v467 = vld [vmem:[#allocation3] sm:$0xff]
    %v468 = vld [vmem:[#allocation4] sm:$0xff]
    %s469 = scalar_lea.vmem [#allocation2], 8
    %v470 = vld [vmem:[%s469] sm:$0xf]
    %v471 = vunpack.c.l.bf16 %v470
    %v472 = vpack.c.bf16 %v467, %v467
    %v473 = vld [vmem:[#allocation11] sm:$0xf]
    %v474 = vld [vmem:[#allocation11 + $0x4] sm:$0xf]
    %v475 = vld [vmem:[#allocation11 + $0x8] sm:$0xf]
    %v476 = vld [vmem:[#allocation11 + $0xc] sm:$0xf]
    %v481 = vunpack.c.l.b16 %v473
    %v482 = vunpack.c.l.b16 %v474
    %v483 = vunpack.c.l.b16 %v475
    %v484 = vunpack.c.l.b16 %v476
    %v485 = vpack.c.b16 %v482, %v481
    %v486 = vpack.c.b16 %v484, %v483
    %v490 = vsel %vm148, %v472, 0
    %492 = vmatprep.subr.bf16.mxu0 0
    %493 = vmatpush1.bf16.msra.mxu0 0
    %494 = vmatprep.subr.bf16.mxu0 0
    %495 = vmatpush1.bf16.msra.mxu0 0
    %496 = vmatprep.subr.bf16.mxu0 0
    %497 = vmatpush1.bf16.msra.mxu0 0
    %498 = vmatprep.subr.bf16.mxu0 0
    %499 = vmatpush1.bf16.msra.mxu0 0
    %500 = vmatprep.subr.bf16.mxu0 0
    %501 = vmatpush1.bf16.msra.mxu0 0
    %502 = vmatprep.subr.bf16.mxu0 0
    %503 = vmatpush1.bf16.msra.mxu0 0
    %504 = vmatprep.subr.bf16.mxu0 0
    %505 = vmatpush1.bf16.msra.mxu0 %v486
    %506 = vmatprep.subr.bf16.mxu0 0
    %507 = vmatpush1.bf16.msra.mxu0 %v485
    %508 = vmatprep.subr.bf16.mxu0 0
    %509 = vmatpush2.bf16.msra.mxu0 0
    %510 = vmatprep.subr.bf16.mxu0 0
    %511 = vmatpush2.bf16.msra.mxu0 0
    %512 = vmatprep.subr.bf16.mxu0 0
    %513 = vmatpush2.bf16.msra.mxu0 0
    %514 = vmatprep.subr.bf16.mxu0 0
    %515 = vmatpush2.bf16.msra.mxu0 0
    %516 = vmatprep.subr.bf16.mxu0 0
    %517 = vmatpush2.bf16.msra.mxu0 0
    %518 = vmatprep.subr.bf16.mxu0 0
    %519 = vmatpush2.bf16.msra.mxu0 0
    %520 = vmatprep.subr.bf16.mxu0 0
    %521 = vmatpush2.bf16.msra.mxu0 0
    %522 = vmatprep.subr.bf16.mxu0 0
    %523 = vmatpush2.bf16.msra.mxu0 0
    %524 = vmatprep.mubr.bf16.mxu0 0
    %525 = vmatmul.mubr.bf16.gmra.mxu0 %v490
    %v526 = vpop.f32.mrf.mxu0
    %v527 = vadd.f32 0.0, %v526
    %v528 = vpop.f32.mrf.mxu0
    %v529 = vpop.f32.mrf.mxu0
    %v530 = vpop.f32.mrf.mxu0
    %531 = vdwg.mxu0
    %v532 = vadd.f32 %v471, %v527
    %v533 = vtanh.pop %v532
    %v534 = vxor.u32 %v532, 2147483648
    %v535 = vmul.f32 %v534, 1.442695
    %v536 = vpow.pop %v535
    %v537 = vadd.f32 %v536, 1.0
    %v538 = vrcp.pop %v537
    %v539 = vmul.f32 1.0, %v538
    %v540 = vsel %vm251, %v533, %v539
    %542 = vrot.lane.b32.xlu0 %v468, 32
    %v543 = vpop.permute.xlu0 %542
    %v545 = vmul.f32 %v540, %v543
    %547 = vrot.lane.b32.xlu0 %v540, 64
    %v548 = vpop.permute.xlu0 %547
    %v550 = vmul.f32 %v540, %v548
    %552 = vrot.lane.b32.xlu0 %v550, 32
    %v553 = vpop.permute.xlu0 %552
    %v555 = vadd.f32 %v545, %v553
    %v556 = vtanh.pop %v555
    %558 = vrot.lane.b32.xlu0 %v556, 64
    %v559 = vpop.permute.xlu0 %558
    %v561 = vmul.f32 %v540, %v559
    %563 = vrot.lane.b32.xlu0 %v555, 96
    %v564 = vpop.permute.xlu0 %563
    %566 = vst.msk [vmem:[#allocation4] sm:$0xff] %vm148, %v564
    %568 = vrot.lane.b32.xlu0 %v561, 32
    %v569 = vpop.permute.xlu0 %568
    %571 = vst.msk [vmem:[#allocation3] sm:$0xff] %vm148, %v569
    %v572 = vld [vmem:[#allocation5] sm:$0xff]
    %v573 = vmax.f32 %v572, %v569
    %574 = vst.msk [vmem:[#allocation5] sm:$0xff] %vm148, %v573
    %v575 = vld [vmem:[#allocation3] sm:$0xff]
    %v576 = vld [vmem:[#allocation4] sm:$0xff]
    %s577 = scalar_lea.vmem [#allocation2], 12
    %v578 = vld [vmem:[%s577] sm:$0xf]
    %v579 = vunpack.c.l.bf16 %v578
    %v580 = vpack.c.bf16 %v575, %v575
    %v581 = vld [vmem:[#allocation11] sm:$0xf]
    %v582 = vld [vmem:[#allocation11 + $0x4] sm:$0xf]
    %v583 = vld [vmem:[#allocation11 + $0x8] sm:$0xf]
    %v584 = vld [vmem:[#allocation11 + $0xc] sm:$0xf]
    %v589 = vunpack.c.l.b16 %v581
    %v590 = vunpack.c.l.b16 %v582
    %v591 = vunpack.c.l.b16 %v583
    %v592 = vunpack.c.l.b16 %v584
    %v593 = vpack.c.b16 %v590, %v589
    %v594 = vpack.c.b16 %v592, %v591
    %v598 = vsel %vm148, %v580, 0
    %600 = vmatprep.subr.bf16.mxu0 0
    %601 = vmatpush1.bf16.msra.mxu0 0
    %602 = vmatprep.subr.bf16.mxu0 0
    %603 = vmatpush1.bf16.msra.mxu0 0
    %604 = vmatprep.subr.bf16.mxu0 0
    %605 = vmatpush1.bf16.msra.mxu0 0
    %606 = vmatprep.subr.bf16.mxu0 0
    %607 = vmatpush1.bf16.msra.mxu0 0
    %608 = vmatprep.subr.bf16.mxu0 0
    %609 = vmatpush1.bf16.msra.mxu0 0
    %610 = vmatprep.subr.bf16.mxu0 0
    %611 = vmatpush1.bf16.msra.mxu0 0
    %612 = vmatprep.subr.bf16.mxu0 0
    %613 = vmatpush1.bf16.msra.mxu0 %v594
    %614 = vmatprep.subr.bf16.mxu0 0
    %615 = vmatpush1.bf16.msra.mxu0 %v593
    %616 = vmatprep.subr.bf16.mxu0 0
    %617 = vmatpush2.bf16.msra.mxu0 0
    %618 = vmatprep.subr.bf16.mxu0 0
    %619 = vmatpush2.bf16.msra.mxu0 0
    %620 = vmatprep.subr.bf16.mxu0 0
    %621 = vmatpush2.bf16.msra.mxu0 0
    %622 = vmatprep.subr.bf16.mxu0 0
    %623 = vmatpush2.bf16.msra.mxu0 0
    %624 = vmatprep.subr.bf16.mxu0 0
    %625 = vmatpush2.bf16.msra.mxu0 0
    %626 = vmatprep.subr.bf16.mxu0 0
    %627 = vmatpush2.bf16.msra.mxu0 0
    %628 = vmatprep.subr.bf16.mxu0 0
    %629 = vmatpush2.bf16.msra.mxu0 0
    %630 = vmatprep.subr.bf16.mxu0 0
    %631 = vmatpush2.bf16.msra.mxu0 0
    %632 = vmatprep.mubr.bf16.mxu0 0
    %633 = vmatmul.mubr.bf16.gmra.mxu0 %v598
    %v634 = vpop.f32.mrf.mxu0
    %v635 = vadd.f32 0.0, %v634
    %v636 = vpop.f32.mrf.mxu0
    %v637 = vpop.f32.mrf.mxu0
    %v638 = vpop.f32.mrf.mxu0
    %639 = vdwg.mxu0
    %v640 = vadd.f32 %v579, %v635
    %v641 = vtanh.pop %v640
    %v642 = vxor.u32 %v640, 2147483648
    %v643 = vmul.f32 %v642, 1.442695
    %v644 = vpow.pop %v643
    %v645 = vadd.f32 %v644, 1.0
    %v646 = vrcp.pop %v645
    %v647 = vmul.f32 1.0, %v646
    %v648 = vsel %vm251, %v641, %v647
    %650 = vrot.lane.b32.xlu0 %v576, 32
    %v651 = vpop.permute.xlu0 %650
    %v653 = vmul.f32 %v648, %v651
    %655 = vrot.lane.b32.xlu0 %v648, 64
    %v656 = vpop.permute.xlu0 %655
    %v658 = vmul.f32 %v648, %v656
    %660 = vrot.lane.b32.xlu0 %v658, 32
    %v661 = vpop.permute.xlu0 %660
    %v663 = vadd.f32 %v653, %v661
    %v664 = vtanh.pop %v663
    %666 = vrot.lane.b32.xlu0 %v664, 64
    %v667 = vpop.permute.xlu0 %666
    %v669 = vmul.f32 %v648, %v667
    %671 = vrot.lane.b32.xlu0 %v663, 96
    %v672 = vpop.permute.xlu0 %671
    %674 = vst.msk [vmem:[#allocation4] sm:$0xff] %vm148, %v672
    %676 = vrot.lane.b32.xlu0 %v669, 32
    %v677 = vpop.permute.xlu0 %676
    %679 = vst.msk [vmem:[#allocation3] sm:$0xff] %vm148, %v677
    %v680 = vld [vmem:[#allocation5] sm:$0xff]
    %v681 = vmax.f32 %v680, %v677
    %682 = vst.msk [vmem:[#allocation5] sm:$0xff] %vm148, %v681
    %v683 = vld [vmem:[#allocation3] sm:$0xff]
    %v684 = vld [vmem:[#allocation4] sm:$0xff]
    %s685 = scalar_lea.vmem [#allocation2], 16
    %v686 = vld [vmem:[%s685] sm:$0xf]
    %v687 = vunpack.c.l.bf16 %v686
    %v688 = vpack.c.bf16 %v683, %v683
    %v689 = vld [vmem:[#allocation11] sm:$0xf]
    %v690 = vld [vmem:[#allocation11 + $0x4] sm:$0xf]
    %v691 = vld [vmem:[#allocation11 + $0x8] sm:$0xf]
    %v692 = vld [vmem:[#allocation11 + $0xc] sm:$0xf]
    %v697 = vunpack.c.l.b16 %v689
    %v698 = vunpack.c.l.b16 %v690
    %v699 = vunpack.c.l.b16 %v691
    %v700 = vunpack.c.l.b16 %v692
    %v701 = vpack.c.b16 %v698, %v697
    %v702 = vpack.c.b16 %v700, %v699
    %v706 = vsel %vm148, %v688, 0
    %708 = vmatprep.subr.bf16.mxu0 0
    %709 = vmatpush1.bf16.msra.mxu0 0
    %710 = vmatprep.subr.bf16.mxu0 0
    %711 = vmatpush1.bf16.msra.mxu0 0
    %712 = vmatprep.subr.bf16.mxu0 0
    %713 = vmatpush1.bf16.msra.mxu0 0
    %714 = vmatprep.subr.bf16.mxu0 0
    %715 = vmatpush1.bf16.msra.mxu0 0
    %716 = vmatprep.subr.bf16.mxu0 0
    %717 = vmatpush1.bf16.msra.mxu0 0
    %718 = vmatprep.subr.bf16.mxu0 0
    %719 = vmatpush1.bf16.msra.mxu0 0
    %720 = vmatprep.subr.bf16.mxu0 0
    %721 = vmatpush1.bf16.msra.mxu0 %v702
    %722 = vmatprep.subr.bf16.mxu0 0
    %723 = vmatpush1.bf16.msra.mxu0 %v701
    %724 = vmatprep.subr.bf16.mxu0 0
    %725 = vmatpush2.bf16.msra.mxu0 0
    %726 = vmatprep.subr.bf16.mxu0 0
    %727 = vmatpush2.bf16.msra.mxu0 0
    %728 = vmatprep.subr.bf16.mxu0 0
    %729 = vmatpush2.bf16.msra.mxu0 0
    %730 = vmatprep.subr.bf16.mxu0 0
    %731 = vmatpush2.bf16.msra.mxu0 0
    %732 = vmatprep.subr.bf16.mxu0 0
    %733 = vmatpush2.bf16.msra.mxu0 0
    %734 = vmatprep.subr.bf16.mxu0 0
    %735 = vmatpush2.bf16.msra.mxu0 0
    %736 = vmatprep.subr.bf16.mxu0 0
    %737 = vmatpush2.bf16.msra.mxu0 0
    %738 = vmatprep.subr.bf16.mxu0 0
    %739 = vmatpush2.bf16.msra.mxu0 0
    %740 = vmatprep.mubr.bf16.mxu0 0
    %741 = vmatmul.mubr.bf16.gmra.mxu0 %v706
    %v742 = vpop.f32.mrf.mxu0
    %v743 = vadd.f32 0.0, %v742
    %v744 = vpop.f32.mrf.mxu0
    %v745 = vpop.f32.mrf.mxu0
    %v746 = vpop.f32.mrf.mxu0
    %747 = vdwg.mxu0
    %v748 = vadd.f32 %v687, %v743
    %v749 = vtanh.pop %v748
    %v750 = vxor.u32 %v748, 2147483648
    %v751 = vmul.f32 %v750, 1.442695
    %v752 = vpow.pop %v751
    %v753 = vadd.f32 %v752, 1.0
    %v754 = vrcp.pop %v753
    %v755 = vmul.f32 1.0, %v754
    %v756 = vsel %vm251, %v749, %v755
    %758 = vrot.lane.b32.xlu0 %v684, 32
    %v759 = vpop.permute.xlu0 %758
    %v761 = vmul.f32 %v756, %v759
    %763 = vrot.lane.b32.xlu0 %v756, 64
    %v764 = vpop.permute.xlu0 %763
    %v766 = vmul.f32 %v756, %v764
    %768 = vrot.lane.b32.xlu0 %v766, 32
    %v769 = vpop.permute.xlu0 %768
    %v771 = vadd.f32 %v761, %v769
    %v772 = vtanh.pop %v771
    %774 = vrot.lane.b32.xlu0 %v772, 64
    %v775 = vpop.permute.xlu0 %774
    %v777 = vmul.f32 %v756, %v775
    %779 = vrot.lane.b32.xlu0 %v771, 96
    %v780 = vpop.permute.xlu0 %779
    %782 = vst.msk [vmem:[#allocation4] sm:$0xff] %vm148, %v780
    %784 = vrot.lane.b32.xlu0 %v777, 32
    %v785 = vpop.permute.xlu0 %784
    %787 = vst.msk [vmem:[#allocation3] sm:$0xff] %vm148, %v785
    %v788 = vld [vmem:[#allocation5] sm:$0xff]
    %v789 = vmax.f32 %v788, %v785
    %790 = vst.msk [vmem:[#allocation5] sm:$0xff] %vm148, %v789
    %v791 = vld [vmem:[#allocation3] sm:$0xff]
    %v792 = vld [vmem:[#allocation4] sm:$0xff]
    %s793 = scalar_lea.vmem [#allocation2], 20
    %v794 = vld [vmem:[%s793] sm:$0xf]
    %v795 = vunpack.c.l.bf16 %v794
    %v796 = vpack.c.bf16 %v791, %v791
    %v797 = vld [vmem:[#allocation11] sm:$0xf]
    %v798 = vld [vmem:[#allocation11 + $0x4] sm:$0xf]
    %v799 = vld [vmem:[#allocation11 + $0x8] sm:$0xf]
    %v800 = vld [vmem:[#allocation11 + $0xc] sm:$0xf]
    %v805 = vunpack.c.l.b16 %v797
    %v806 = vunpack.c.l.b16 %v798
    %v807 = vunpack.c.l.b16 %v799
    %v808 = vunpack.c.l.b16 %v800
    %v809 = vpack.c.b16 %v806, %v805
    %v810 = vpack.c.b16 %v808, %v807
    %v814 = vsel %vm148, %v796, 0
    %816 = vmatprep.subr.bf16.mxu0 0
    %817 = vmatpush1.bf16.msra.mxu0 0
    %818 = vmatprep.subr.bf16.mxu0 0
    %819 = vmatpush1.bf16.msra.mxu0 0
    %820 = vmatprep.subr.bf16.mxu0 0
    %821 = vmatpush1.bf16.msra.mxu0 0
    %822 = vmatprep.subr.bf16.mxu0 0
    %823 = vmatpush1.bf16.msra.mxu0 0
    %824 = vmatprep.subr.bf16.mxu0 0
    %825 = vmatpush1.bf16.msra.mxu0 0
    %826 = vmatprep.subr.bf16.mxu0 0
    %827 = vmatpush1.bf16.msra.mxu0 0
    %828 = vmatprep.subr.bf16.mxu0 0
    %829 = vmatpush1.bf16.msra.mxu0 %v810
    %830 = vmatprep.subr.bf16.mxu0 0
    %831 = vmatpush1.bf16.msra.mxu0 %v809
    %832 = vmatprep.subr.bf16.mxu0 0
    %833 = vmatpush2.bf16.msra.mxu0 0
    %834 = vmatprep.subr.bf16.mxu0 0
    %835 = vmatpush2.bf16.msra.mxu0 0
    %836 = vmatprep.subr.bf16.mxu0 0
    %837 = vmatpush2.bf16.msra.mxu0 0
    %838 = vmatprep.subr.bf16.mxu0 0
    %839 = vmatpush2.bf16.msra.mxu0 0
    %840 = vmatprep.subr.bf16.mxu0 0
    %841 = vmatpush2.bf16.msra.mxu0 0
    %842 = vmatprep.subr.bf16.mxu0 0
    %843 = vmatpush2.bf16.msra.mxu0 0
    %844 = vmatprep.subr.bf16.mxu0 0
    %845 = vmatpush2.bf16.msra.mxu0 0
    %846 = vmatprep.subr.bf16.mxu0 0
    %847 = vmatpush2.bf16.msra.mxu0 0
    %848 = vmatprep.mubr.bf16.mxu0 0
    %849 = vmatmul.mubr.bf16.gmra.mxu0 %v814
    %v850 = vpop.f32.mrf.mxu0
    %v851 = vadd.f32 0.0, %v850
    %v852 = vpop.f32.mrf.mxu0
    %v853 = vpop.f32.mrf.mxu0
    %v854 = vpop.f32.mrf.mxu0
    %855 = vdwg.mxu0
    %v856 = vadd.f32 %v795, %v851
    %v857 = vtanh.pop %v856
    %v858 = vxor.u32 %v856, 2147483648
    %v859 = vmul.f32 %v858, 1.442695
    %v860 = vpow.pop %v859
    %v861 = vadd.f32 %v860, 1.0
    %v862 = vrcp.pop %v861
    %v863 = vmul.f32 1.0, %v862
    %v864 = vsel %vm251, %v857, %v863
    %866 = vrot.lane.b32.xlu0 %v792, 32
    %v867 = vpop.permute.xlu0 %866
    %v869 = vmul.f32 %v864, %v867
    %871 = vrot.lane.b32.xlu0 %v864, 64
    %v872 = vpop.permute.xlu0 %871
    %v874 = vmul.f32 %v864, %v872
    %876 = vrot.lane.b32.xlu0 %v874, 32
    %v877 = vpop.permute.xlu0 %876
    %v879 = vadd.f32 %v869, %v877
    %v880 = vtanh.pop %v879
    %882 = vrot.lane.b32.xlu0 %v880, 64
    %v883 = vpop.permute.xlu0 %882
    %v885 = vmul.f32 %v864, %v883
    %887 = vrot.lane.b32.xlu0 %v879, 96
    %v888 = vpop.permute.xlu0 %887
    %890 = vst.msk [vmem:[#allocation4] sm:$0xff] %vm148, %v888
    %892 = vrot.lane.b32.xlu0 %v885, 32
    %v893 = vpop.permute.xlu0 %892
    %895 = vst.msk [vmem:[#allocation3] sm:$0xff] %vm148, %v893
    %v896 = vld [vmem:[#allocation5] sm:$0xff]
    %v897 = vmax.f32 %v896, %v893
    %898 = vst.msk [vmem:[#allocation5] sm:$0xff] %vm148, %v897
    %v899 = vld [vmem:[#allocation3] sm:$0xff]
    %v900 = vld [vmem:[#allocation4] sm:$0xff]
    %s901 = scalar_lea.vmem [#allocation2], 24
    %v902 = vld [vmem:[%s901] sm:$0xf]
    %v903 = vunpack.c.l.bf16 %v902
    %v904 = vpack.c.bf16 %v899, %v899
    %v905 = vld [vmem:[#allocation11] sm:$0xf]
    %v906 = vld [vmem:[#allocation11 + $0x4] sm:$0xf]
    %v907 = vld [vmem:[#allocation11 + $0x8] sm:$0xf]
    %v908 = vld [vmem:[#allocation11 + $0xc] sm:$0xf]
    %v913 = vunpack.c.l.b16 %v905
    %v914 = vunpack.c.l.b16 %v906
    %v915 = vunpack.c.l.b16 %v907
    %v916 = vunpack.c.l.b16 %v908
    %v917 = vpack.c.b16 %v914, %v913
    %v918 = vpack.c.b16 %v916, %v915
    %v922 = vsel %vm148, %v904, 0
    %924 = vmatprep.subr.bf16.mxu0 0
    %925 = vmatpush1.bf16.msra.mxu0 0
    %926 = vmatprep.subr.bf16.mxu0 0
    %927 = vmatpush1.bf16.msra.mxu0 0
    %928 = vmatprep.subr.bf16.mxu0 0
    %929 = vmatpush1.bf16.msra.mxu0 0
    %930 = vmatprep.subr.bf16.mxu0 0
    %931 = vmatpush1.bf16.msra.mxu0 0
    %932 = vmatprep.subr.bf16.mxu0 0
    %933 = vmatpush1.bf16.msra.mxu0 0
    %934 = vmatprep.subr.bf16.mxu0 0
    %935 = vmatpush1.bf16.msra.mxu0 0
    %936 = vmatprep.subr.bf16.mxu0 0
    %937 = vmatpush1.bf16.msra.mxu0 %v918
    %938 = vmatprep.subr.bf16.mxu0 0
    %939 = vmatpush1.bf16.msra.mxu0 %v917
    %940 = vmatprep.subr.bf16.mxu0 0
    %941 = vmatpush2.bf16.msra.mxu0 0
    %942 = vmatprep.subr.bf16.mxu0 0
    %943 = vmatpush2.bf16.msra.mxu0 0
    %944 = vmatprep.subr.bf16.mxu0 0
    %945 = vmatpush2.bf16.msra.mxu0 0
    %946 = vmatprep.subr.bf16.mxu0 0
    %947 = vmatpush2.bf16.msra.mxu0 0
    %948 = vmatprep.subr.bf16.mxu0 0
    %949 = vmatpush2.bf16.msra.mxu0 0
    %950 = vmatprep.subr.bf16.mxu0 0
    %951 = vmatpush2.bf16.msra.mxu0 0
    %952 = vmatprep.subr.bf16.mxu0 0
    %953 = vmatpush2.bf16.msra.mxu0 0
    %954 = vmatprep.subr.bf16.mxu0 0
    %955 = vmatpush2.bf16.msra.mxu0 0
    %956 = vmatprep.mubr.bf16.mxu0 0
    %957 = vmatmul.mubr.bf16.gmra.mxu0 %v922
    %v958 = vpop.f32.mrf.mxu0
    %v959 = vadd.f32 0.0, %v958
    %v960 = vpop.f32.mrf.mxu0
    %v961 = vpop.f32.mrf.mxu0
    %v962 = vpop.f32.mrf.mxu0
    %963 = vdwg.mxu0
    %v964 = vadd.f32 %v903, %v959
    %v965 = vtanh.pop %v964
    %v966 = vxor.u32 %v964, 2147483648
    %v967 = vmul.f32 %v966, 1.442695
    %v968 = vpow.pop %v967
    %v969 = vadd.f32 %v968, 1.0
    %v970 = vrcp.pop %v969
    %v971 = vmul.f32 1.0, %v970
    %v972 = vsel %vm251, %v965, %v971
    %974 = vrot.lane.b32.xlu0 %v900, 32
    %v975 = vpop.permute.xlu0 %974
    %v977 = vmul.f32 %v972, %v975
    %979 = vrot.lane.b32.xlu0 %v972, 64
    %v980 = vpop.permute.xlu0 %979
    %v982 = vmul.f32 %v972, %v980
    %984 = vrot.lane.b32.xlu0 %v982, 32
    %v985 = vpop.permute.xlu0 %984
    %v987 = vadd.f32 %v977, %v985
    %v988 = vtanh.pop %v987
    %990 = vrot.lane.b32.xlu0 %v988, 64
    %v991 = vpop.permute.xlu0 %990
    %v993 = vmul.f32 %v972, %v991
    %995 = vrot.lane.b32.xlu0 %v987, 96
    %v996 = vpop.permute.xlu0 %995
    %998 = vst.msk [vmem:[#allocation4] sm:$0xff] %vm148, %v996
    %1000 = vrot.lane.b32.xlu0 %v993, 32
    %v1001 = vpop.permute.xlu0 %1000
    %1003 = vst.msk [vmem:[#allocation3] sm:$0xff] %vm148, %v1001
    %v1004 = vld [vmem:[#allocation5] sm:$0xff]
    %v1005 = vmax.f32 %v1004, %v1001
    %1006 = vst.msk [vmem:[#allocation5] sm:$0xff] %vm148, %v1005
    %v1007 = vld [vmem:[#allocation3] sm:$0xff]
    %v1008 = vld [vmem:[#allocation4] sm:$0xff]
    %s1009 = scalar_lea.vmem [#allocation2], 28
    %v1010 = vld [vmem:[%s1009] sm:$0xf]
    %v1011 = vunpack.c.l.bf16 %v1010
    %v1012 = vpack.c.bf16 %v1007, %v1007
    %v1013 = vld [vmem:[#allocation11] sm:$0xf]
    %v1014 = vld [vmem:[#allocation11 + $0x4] sm:$0xf]
    %v1015 = vld [vmem:[#allocation11 + $0x8] sm:$0xf]
    %v1016 = vld [vmem:[#allocation11 + $0xc] sm:$0xf]
    %v1021 = vunpack.c.l.b16 %v1013
    %v1022 = vunpack.c.l.b16 %v1014
    %v1023 = vunpack.c.l.b16 %v1015
    %v1024 = vunpack.c.l.b16 %v1016
    %v1025 = vpack.c.b16 %v1022, %v1021
    %v1026 = vpack.c.b16 %v1024, %v1023
    %v1030 = vsel %vm148, %v1012, 0
    %1032 = vmatprep.subr.bf16.mxu0 0
    %1033 = vmatpush1.bf16.msra.mxu0 0
    %1034 = vmatprep.subr.bf16.mxu0 0
    %1035 = vmatpush1.bf16.msra.mxu0 0
    %1036 = vmatprep.subr.bf16.mxu0 0
    %1037 = vmatpush1.bf16.msra.mxu0 0
    %1038 = vmatprep.subr.bf16.mxu0 0
    %1039 = vmatpush1.bf16.msra.mxu0 0
    %1040 = vmatprep.subr.bf16.mxu0 0
    %1041 = vmatpush1.bf16.msra.mxu0 0
    %1042 = vmatprep.subr.bf16.mxu0 0
    %1043 = vmatpush1.bf16.msra.mxu0 0
    %1044 = vmatprep.subr.bf16.mxu0 0
    %1045 = vmatpush1.bf16.msra.mxu0 %v1026
    %1046 = vmatprep.subr.bf16.mxu0 0
    %1047 = vmatpush1.bf16.msra.mxu0 %v1025
    %1048 = vmatprep.subr.bf16.mxu0 0
    %1049 = vmatpush2.bf16.msra.mxu0 0
    %1050 = vmatprep.subr.bf16.mxu0 0
    %1051 = vmatpush2.bf16.msra.mxu0 0
    %1052 = vmatprep.subr.bf16.mxu0 0
    %1053 = vmatpush2.bf16.msra.mxu0 0
    %1054 = vmatprep.subr.bf16.mxu0 0
    %1055 = vmatpush2.bf16.msra.mxu0 0
    %1056 = vmatprep.subr.bf16.mxu0 0
    %1057 = vmatpush2.bf16.msra.mxu0 0
    %1058 = vmatprep.subr.bf16.mxu0 0
    %1059 = vmatpush2.bf16.msra.mxu0 0
    %1060 = vmatprep.subr.bf16.mxu0 0
    %1061 = vmatpush2.bf16.msra.mxu0 0
    %1062 = vmatprep.subr.bf16.mxu0 0
    %1063 = vmatpush2.bf16.msra.mxu0 0
    %1064 = vmatprep.mubr.bf16.mxu0 0
    %1065 = vmatmul.mubr.bf16.gmra.mxu0 %v1030
    %v1066 = vpop.f32.mrf.mxu0
    %v1067 = vadd.f32 0.0, %v1066
    %v1068 = vpop.f32.mrf.mxu0
    %v1069 = vpop.f32.mrf.mxu0
    %v1070 = vpop.f32.mrf.mxu0
    %1071 = vdwg.mxu0
    %v1072 = vadd.f32 %v1011, %v1067
    %v1073 = vtanh.pop %v1072
    %v1074 = vxor.u32 %v1072, 2147483648
    %v1075 = vmul.f32 %v1074, 1.442695
    %v1076 = vpow.pop %v1075
    %v1077 = vadd.f32 %v1076, 1.0
    %v1078 = vrcp.pop %v1077
    %v1079 = vmul.f32 1.0, %v1078
    %v1080 = vsel %vm251, %v1073, %v1079
    %1082 = vrot.lane.b32.xlu0 %v1008, 32
    %v1083 = vpop.permute.xlu0 %1082
    %v1085 = vmul.f32 %v1080, %v1083
    %1087 = vrot.lane.b32.xlu0 %v1080, 64
    %v1088 = vpop.permute.xlu0 %1087
    %v1090 = vmul.f32 %v1080, %v1088
    %1092 = vrot.lane.b32.xlu0 %v1090, 32
    %v1093 = vpop.permute.xlu0 %1092
    %v1095 = vadd.f32 %v1085, %v1093
    %v1096 = vtanh.pop %v1095
    %1098 = vrot.lane.b32.xlu0 %v1096, 64
    %v1099 = vpop.permute.xlu0 %1098
    %v1101 = vmul.f32 %v1080, %v1099
    %1103 = vrot.lane.b32.xlu0 %v1095, 96
    %v1104 = vpop.permute.xlu0 %1103
    %1106 = vst.msk [vmem:[#allocation4] sm:$0xff] %vm148, %v1104
    %1108 = vrot.lane.b32.xlu0 %v1101, 32
    %v1109 = vpop.permute.xlu0 %1108
    %1111 = vst.msk [vmem:[#allocation3] sm:$0xff] %vm148, %v1109
    %v1112 = vld [vmem:[#allocation5] sm:$0xff]
    %v1113 = vmax.f32 %v1112, %v1109
    %1114 = vst.msk [vmem:[#allocation5] sm:$0xff] %vm148, %v1113
    %v1115 = vld [vmem:[#allocation5] sm:$0xff]
    %v1116 = vtanh.pop %v1115
    %v1117 = vpack.c.bf16 %v1116, %v1116
    %v1118 = vld [vmem:[#allocation14] sm:$0xf]
    %v1119 = vld [vmem:[#allocation14 + $0x4] sm:$0xf]
    %v1120 = vld [vmem:[#allocation14 + $0x8] sm:$0xf]
    %v1121 = vld [vmem:[#allocation14 + $0xc] sm:$0xf]
    %v1122 = vld [vmem:[%s7] sm:$0x1]
    %v1124 = vlaneseq
    %v1125 = vshrl.u32 %v1124, 7
    %v1126 = vsub.s32 0, %v1125
    %v1127 = vrot.slane %v1122, %v1126
    %v1133 = vunpack.c.l.b16 %v1118
    %v1134 = vunpack.c.l.b16 %v1119
    %v1135 = vunpack.c.l.b16 %v1120
    %v1136 = vunpack.c.l.b16 %v1121
    %v1137 = vpack.c.b16 %v1134, %v1133
    %v1138 = vpack.c.b16 %v1136, %v1135
    %v1142 = vsel %vm148, %v1117, 0
    %1144 = vmatprep.subr.bf16.mxu0 0
    %1145 = vmatpush1.bf16.msra.mxu0 0
    %1146 = vmatprep.subr.bf16.mxu0 0
    %1147 = vmatpush1.bf16.msra.mxu0 0
    %1148 = vmatprep.subr.bf16.mxu0 0
    %1149 = vmatpush1.bf16.msra.mxu0 0
    %1150 = vmatprep.subr.bf16.mxu0 0
    %1151 = vmatpush1.bf16.msra.mxu0 0
    %1152 = vmatprep.subr.bf16.mxu0 0
    %1153 = vmatpush1.bf16.msra.mxu0 0
    %1154 = vmatprep.subr.bf16.mxu0 0
    %1155 = vmatpush1.bf16.msra.mxu0 0
    %1156 = vmatprep.subr.bf16.mxu0 0
    %1157 = vmatpush1.bf16.msra.mxu0 %v1138
    %1158 = vmatprep.subr.bf16.mxu0 0
    %1159 = vmatpush1.bf16.msra.mxu0 %v1137
    %1160 = vmatprep.subr.bf16.mxu0 0
    %1161 = vmatpush2.bf16.msra.mxu0 0
    %1162 = vmatprep.subr.bf16.mxu0 0
    %1163 = vmatpush2.bf16.msra.mxu0 0
    %1164 = vmatprep.subr.bf16.mxu0 0
    %1165 = vmatpush2.bf16.msra.mxu0 0
    %1166 = vmatprep.subr.bf16.mxu0 0
    %1167 = vmatpush2.bf16.msra.mxu0 0
    %1168 = vmatprep.subr.bf16.mxu0 0
    %1169 = vmatpush2.bf16.msra.mxu0 0
    %1170 = vmatprep.subr.bf16.mxu0 0
    %1171 = vmatpush2.bf16.msra.mxu0 0
    %1172 = vmatprep.subr.bf16.mxu0 0
    %1173 = vmatpush2.bf16.msra.mxu0 0
    %1174 = vmatprep.subr.bf16.mxu0 0
    %1175 = vmatpush2.bf16.msra.mxu0 0
    %1176 = vmatprep.mubr.bf16.mxu0 0
    %1177 = vmatmul.mubr.bf16.gmra.mxu0 %v1142
    %v1178 = vpop.f32.mrf.mxu0
    %v1179 = vadd.f32 %v1127, %v1178
    %v1180 = vpop.f32.mrf.mxu0
    %v1181 = vpop.f32.mrf.mxu0
    %v1182 = vpop.f32.mrf.mxu0
    %1183 = vdwg.mxu0
    %1184 = vst [vmem:[#allocation15] sm:$0xff] %v1179
    // Predicated region
    $region54: #{tpu_custom_call.1} parent=1 // pred_check
      _
    $region55: #{tpu_custom_call.1} parent=1 // pred_check_branch
      %1186 = sbr.rel (0) target = $region57
    $region56: #{tpu_custom_call.1} parent=1 // pred_region
      %s1188 = ssub.s32 128, 128
      %1189 = vsyncadd [#allocation8], %s1188
      %s1191 = sshll.u32 [#allocation15], 4
      %s1192 = int_to_ptr.vmem [resolvable:$true] %s1191
      %1194 = dma.vmem_to_hbm [thread:$0]  %s1192, 128, %s8, [#allocation8]
    $region57: #{tpu_custom_call.1} parent=1 // pred_fallthru
      _
    // Predicated region
    $region58: #{tpu_custom_call.1} parent=1 // pred_check
      _
    $region59: #{tpu_custom_call.1} parent=1 // pred_check_branch
      %1196 = sbr.rel (0) target = $region61
    $region60: #{tpu_custom_call.1} parent=1 // pred_region
      %1197 = dma.done [#allocation8], 128
    $region61: #{tpu_custom_call.1} parent=1 // pred_fallthru
      _
    %1198 = vsyncpa [#allocation7], 1
    %1199 = vsyncpa [#allocation10], 1
    %1200 = vsyncpa [#allocation13], 1
    %1201 = vsyncpa [#allocation8], 1

</llo_original>
